<compile_context>
chip_gen: v7x
topology: tpu7x:2x2x1
jax: 0.10.0
libtpu: 0.0.40
codegen_flags: <defaults>
</compile_context>

<pallas_src>
import functools

import jax
import jax.numpy as jnp
from jax import lax
from jax.experimental import pallas as pl
from jax.experimental.pallas import tpu as pltpu


def _round_up(x, m):
    return ((x + m - 1) // m) * m


def _choose_t_blk(T, target):
    """Largest chunk length <= target that divides T (keeps padded timesteps out)."""
    for cand in range(min(T, target), 0, -1):
        if T % cand == 0:
            return cand
    return 1


def lstm_chunk_kernel(x_ref, wih_ref, whh_ref, b_ref, h_out_ref,
                      h_sc, c_sc, xp_sc, *, unroll):
    """One grid step == one T-chunk of the sequence.

    x_ref    : (T_blk, Bp, D)   time-major input chunk (pipelined DMA)
    wih_ref  : (D, 4*Hp)        W_ih^T, gate-wise lane-padded   (resident)
    whh_ref  : (Hp, 4*Hp)       W_hh^T, gate-wise lane-padded   (resident)
    b_ref    : (1, 4*Hp)        b_ih + b_hh, gate-wise padded   (resident)
    h_out_ref: (Bp, Hp)         final hidden state (written on last chunk only)
    h_sc/c_sc: (Bp, Hp)         recurrent carry, persists across grid steps
    xp_sc    : (T_blk, Bp, 4Hp) per-chunk input projection staging buffer
    """
    t_idx = pl.program_id(0)
    T_blk, B, D = x_ref.shape
    Hp = h_sc.shape[1]

    @pl.when(t_idx == 0)
    def _():
        h_sc[...] = jnp.zeros_like(h_sc)
        c_sc[...] = jnp.zeros_like(c_sc)

    # Fused time-parallel input projection for this chunk: a single MXU matmul
    # with real M = T_blk*B (Bp is a multiple of 8, so the reshape is
    # tile/layout-preserving).  Bias folded in here, off the serial path.
    x_flat = x_ref[...].reshape(T_blk * B, D)
    xp = jnp.dot(x_flat, wih_ref[...], preferred_element_type=jnp.float32)
    xp = xp + b_ref[...]
    xp_sc[...] = xp.reshape(T_blk, B, 4 * Hp)

    whh = whh_ref[...]  # hoist the weight load out of the recurrence

    def step(tt, carry):
        h, c = carry
        # single fused MXU op on the latency-critical path
        gates = xp_sc[tt] + jnp.dot(h, whh, preferred_element_type=jnp.float32)
        # gate slices are 128-lane aligned (Hp is a multiple of 128): no masked
        # sub-tile extracts on the serial path.
        i_g = jax.nn.sigmoid(gates[:, 0 * Hp:1 * Hp])
        f_g = jax.nn.sigmoid(gates[:, 1 * Hp:2 * Hp])
        g_g = jnp.tanh(gates[:, 2 * Hp:3 * Hp])
        o_g = jax.nn.sigmoid(gates[:, 3 * Hp:4 * Hp])
        c_new = f_g * c + i_g * g_g
        h_new = o_g * jnp.tanh(c_new)
        return h_new, c_new

    h_n, c_n = lax.fori_loop(0, T_blk, step, (h_sc[...], c_sc[...]),
                             unroll=unroll)
    h_sc[...] = h_n
    c_sc[...] = c_n

    @pl.when(t_idx == pl.num_programs(0) - 1)
    def _():
        h_out_ref[...] = h_n


def lstm_model_forward(x, params, *, t_blk_target=8, unroll=4):
    """x: (batch, seq, input_size) float32  ->  (batch, 1) float32."""
    B, T, D = x.shape
    H = params["w_hh"].shape[0]                       # w_hh stored as (H, 4H)
    Hp = _round_up(H, 128)                            # gate-aligned lane padding
    Bp = _round_up(B, 8)                              # sublane padding
    T_blk = _choose_t_blk(T, t_blk_target)
    unroll = max(1, min(unroll, T_blk))
    n_chunks = T // T_blk

    # ---- gate-wise padding: each gate occupies its own Hp-wide lane block.
    # Zero-padded columns give gates=0 -> c_pad stays 0, h_pad stays 0, so the
    # padded lanes never contaminate the real H columns (numerically exact).
    def pad_gate_cols(w):                             # (..., 4H) -> (..., 4Hp)
        parts = jnp.split(w, 4, axis=-1)
        pad_width = [(0, 0)] * (w.ndim - 1) + [(0, Hp - H)]
        return jnp.concatenate([jnp.pad(p, pad_width) for p in parts], axis=-1)

    wih_p = pad_gate_cols(params["w_ih"])                                   # (D, 4Hp)
    whh_p = jnp.pad(pad_gate_cols(params["w_hh"]), ((0, Hp - H), (0, 0)))   # (Hp, 4Hp)
    bias_p = pad_gate_cols((params["b_ih"] + params["b_hh"])[None, :])      # (1, 4Hp)

    # Batch-pad and go time-major.  x itself is small (D-wide); the 4H-wide
    # projection never exists in HBM because it is fused into the kernel.
    x_tm = jnp.transpose(jnp.pad(x, ((0, Bp - B), (0, 0), (0, 0))), (1, 0, 2))  # (T,Bp,D)

    # VMEM budget (double-buffer everything BlockSpec-managed) + headroom,
    # clamped to 64 MiB so the same plan is valid on v7x.
    f32 = 4
    est = (2 * T_blk * Bp * D * f32          # x chunk (double-buffered)
           + 2 * D * 4 * Hp * f32            # W_ih^T
           + 2 * Hp * 4 * Hp * f32           # W_hh^T
           + 2 * 8 * 4 * Hp * f32            # bias (sublane-padded)
           + 2 * Bp * Hp * f32               # h_out
           + 2 * Bp * Hp * f32               # h/c carry scratch
           + T_blk * Bp * 4 * Hp * f32)      # projection staging scratch
    vmem_limit = int(min(64 << 20, max(2 * est, 8 << 20)))

    kernel = functools.partial(lstm_chunk_kernel, unroll=unroll)

    h_pad = pl.pallas_call(
        kernel,
        out_shape=jax.ShapeDtypeStruct((Bp, Hp), jnp.float32),
        grid_spec=pltpu.PrefetchScalarGridSpec(
            num_scalar_prefetch=0,
            grid=(n_chunks,),
            in_specs=[
                pl.BlockSpec((T_blk, Bp, D), lambda t: (t, 0, 0)),  # x chunk (pipelined)
                pl.BlockSpec((D, 4 * Hp), lambda t: (0, 0)),        # W_ih^T  (resident)
                pl.BlockSpec((Hp, 4 * Hp), lambda t: (0, 0)),       # W_hh^T  (resident)
                pl.BlockSpec((1, 4 * Hp), lambda t: (0, 0)),        # bias    (resident)
            ],
            out_specs=pl.BlockSpec((Bp, Hp), lambda t: (0, 0)),
            scratch_shapes=[
                pltpu.VMEM((Bp, Hp), jnp.float32),              # h carry
                pltpu.VMEM((Bp, Hp), jnp.float32),              # c carry
                pltpu.VMEM((T_blk, Bp, 4 * Hp), jnp.float32),   # x-projection staging
            ],
        ),
        compiler_params=pltpu.CompilerParams(
            dimension_semantics=("arbitrary",),   # sequential recurrence over T chunks
            vmem_limit_bytes=vmem_limit,
        ),
    )(x_tm, wih_p, whh_p, bias_p)

    h_n = h_pad[:B, :H]
    # TODO(synk): dropout is identity here (inference/eval semantics); training-mode
    # dropout mask generation is not reproduced.
    # FC is a tiny lane-sparse (H,1) GEMV -> plain JAX.
    return h_n @ params["fc_w"] + params["fc_b"].reshape(1, 1)


def reference_forward(x, params):
    """Pure-JAX reference matching PyTorch nn.LSTM + nn.Linear (eval mode)."""
    B, T, D = x.shape
    H = params["w_hh"].shape[0]
    b = params["b_ih"] + params["b_hh"]

    def step(carry, x_t):
        h, c = carry
        gates = x_t @ params["w_ih"] + h @ params["w_hh"] + b
        i = jax.nn.sigmoid(gates[:, 0 * H:1 * H])
        f = jax.nn.sigmoid(gates[:, 1 * H:2 * H])
        g = jnp.tanh(gates[:, 2 * H:3 * H])
        o = jax.nn.sigmoid(gates[:, 3 * H:4 * H])
        c = f * c + i * g
        h = o * jnp.tanh(c)
        return (h, c), None

    h0 = jnp.zeros((B, H), jnp.float32)
    c0 = jnp.zeros((B, H), jnp.float32)
    (h_n, _), _ = lax.scan(step, (h0, c0), jnp.transpose(x, (1, 0, 2)))
    return h_n @ params["fc_w"] + params["fc_b"].reshape(1, 1)


def init_params(key, input_size, hidden_size):
    """Deterministic init; shapes mirror nn.LSTM/nn.Linear (weights stored transposed)."""
    ks = jax.random.split(key, 6)
    bound = 1.0 / jnp.sqrt(hidden_size)
    u = lambda k, shape: jax.random.uniform(k, shape, jnp.float32, -bound, bound)
    return {
        "w_ih": u(ks[0], (input_size, 4 * hidden_size)),   # == nn.LSTM weight_ih_l0^T
        "w_hh": u(ks[1], (hidden_size, 4 * hidden_size)),  # == nn.LSTM weight_hh_l0^T
        "b_ih": u(ks[2], (4 * hidden_size,)),
        "b_hh": u(ks[3], (4 * hidden_size,)),
        "fc_w": u(ks[4], (hidden_size, 1)),                # == nn.Linear weight^T
        "fc_b": u(ks[5], (1,)),
    }


if __name__ == "__main__":
    B, T, D, H = 2, 8, 16, 32
    key = jax.random.PRNGKey(0)
    k_x, k_p = jax.random.split(key)
    x = jax.random.normal(k_x, (B, T, D), jnp.float32)
    params = init_params(k_p, D, H)

    # t_blk_target=4 -> grid=(2,): exercises the chunked pipeline and the
    # cross-chunk h/c carry in scratch.
    out = lstm_model_forward(x, params, t_blk_target=4, unroll=4)
    out = jax.block_until_ready(out)

    ref = reference_forward(x, params)
    assert out.shape == (B, 1), out.shape
    assert jnp.allclose(out, ref, atol=1e-5, rtol=1e-5), (out, ref)
    print("KERNEL_OK")
</pallas_src>

<mosaic_0001>
module attributes {stable_mosaic.version = 11 : i64} {
  func.func @lstm_chunk_kernel(%arg0: i32, %arg1: memref<4x8x16xf32, #tpu.memory_space<vmem>>, %arg2: memref<16x512xf32, #tpu.memory_space<vmem>>, %arg3: memref<128x512xf32, #tpu.memory_space<vmem>>, %arg4: memref<1x512xf32, #tpu.memory_space<vmem>>, %arg5: memref<8x128xf32, #tpu.memory_space<vmem>>, %arg6: memref<8x128xf32, #tpu.memory_space<vmem>>, %arg7: memref<8x128xf32, #tpu.memory_space<vmem>>, %arg8: memref<4x8x512xf32, #tpu.memory_space<vmem>>) attributes {dimension_semantics = [#tpu.dimension_semantics<arbitrary>], iteration_bounds = array<i64: 2>, scalar_prefetch = 0 : i64, scratch_operands = 3 : i64, tpu.core_type = #tpu.core_type<tc>, window_params = [{transform_indices = @transform_0, window_bounds = array<i64: 4, 8, 16>}, {pipeline_mode = #tpu.pipeline_mode<synchronous>, transform_indices = @transform_1, window_bounds = array<i64: 16, 512>}, {pipeline_mode = #tpu.pipeline_mode<synchronous>, transform_indices = @transform_2, window_bounds = array<i64: 128, 512>}, {pipeline_mode = #tpu.pipeline_mode<synchronous>, transform_indices = @transform_3, window_bounds = array<i64: 1, 512>}, {pipeline_mode = #tpu.pipeline_mode<synchronous>, transform_indices = @transform_4, window_bounds = array<i64: 8, 128>}]} {
    %c0_i32 = arith.constant 0 : i32
    %0 = arith.cmpi eq, %arg0, %c0_i32 : i32
    %1 = arith.extui %0 : i1 to i32
    %c0_i32_0 = arith.constant 0 : i32
    %2 = arith.cmpi ne, %1, %c0_i32_0 : i32
    scf.if %2 {
      %cst_47 = arith.constant 0.000000e+00 : f32
      %140 = vector.broadcast %cst_47 : f32 to vector<8x128xf32>
      %c0_48 = arith.constant 0 : index
      %c0_49 = arith.constant 0 : index
      %141 = vector.load %arg6[%c0_48, %c0_49] : memref<8x128xf32, #tpu.memory_space<vmem>>, vector<8x128xf32>
      tpu.vector_store %arg6[%c0_48, %c0_49], %140 {strides = array<i32>} : memref<8x128xf32, #tpu.memory_space<vmem>>, vector<8x128xf32>,
      %cst_50 = arith.constant 0.000000e+00 : f32
      %142 = vector.broadcast %cst_50 : f32 to vector<8x128xf32>
      %c0_51 = arith.constant 0 : index
      %c0_52 = arith.constant 0 : index
      %143 = vector.load %arg7[%c0_51, %c0_52] : memref<8x128xf32, #tpu.memory_space<vmem>>, vector<8x128xf32>
      tpu.vector_store %arg7[%c0_51, %c0_52], %142 {strides = array<i32>} : memref<8x128xf32, #tpu.memory_space<vmem>>, vector<8x128xf32>,
    } else {
    }
    %c0 = arith.constant 0 : index
    %c0_1 = arith.constant 0 : index
    %c0_2 = arith.constant 0 : index
    %3 = vector.load %arg1[%c0, %c0_1, %c0_2] : memref<4x8x16xf32, #tpu.memory_space<vmem>>, vector<4x8x16xf32>
    %4 = vector.shape_cast %3 : vector<4x8x16xf32> to vector<32x16xf32>
    %c0_3 = arith.constant 0 : index
    %c0_4 = arith.constant 0 : index
    %5 = vector.load %arg2[%c0_3, %c0_4] : memref<16x512xf32, #tpu.memory_space<vmem>>, vector<16x512xf32>
    %cst = arith.constant dense<0.000000e+00> : vector<32x512xf32>
    %6 = tpu.matmul %4, %5, %cst {dimension_numbers = #tpu.dot_dimension_numbers<[1], [0], [0], [1], [0, 0, 1, 1], [], []>} : vector<32x16xf32>, vector<16x512xf32>, vector<32x512xf32> -> vector<32x512xf32>
    %c0_5 = arith.constant 0 : index
    %c0_6 = arith.constant 0 : index
    %7 = vector.load %arg4[%c0_5, %c0_6] : memref<1x512xf32, #tpu.memory_space<vmem>>, vector<1x512xf32>
    %8 = vector.broadcast %7 : vector<1x512xf32> to vector<32x512xf32>
    %9 = arith.addf %6, %8 : vector<32x512xf32>
    %10 = vector.shape_cast %9 : vector<32x512xf32> to vector<4x8x512xf32>
    %c0_7 = arith.constant 0 : index
    %c0_8 = arith.constant 0 : index
    %c0_9 = arith.constant 0 : index
    %11 = vector.load %arg8[%c0_7, %c0_8, %c0_9] : memref<4x8x512xf32, #tpu.memory_space<vmem>>, vector<4x8x512xf32>
    tpu.vector_store %arg8[%c0_7, %c0_8, %c0_9], %10 {strides = array<i32>} : memref<4x8x512xf32, #tpu.memory_space<vmem>>, vector<4x8x512xf32>,
    %c0_10 = arith.constant 0 : index
    %c0_11 = arith.constant 0 : index
    %12 = vector.load %arg3[%c0_10, %c0_11] : memref<128x512xf32, #tpu.memory_space<vmem>>, vector<128x512xf32>
    %c0_12 = arith.constant 0 : index
    %c0_13 = arith.constant 0 : index
    %13 = vector.load %arg6[%c0_12, %c0_13] : memref<8x128xf32, #tpu.memory_space<vmem>>, vector<8x128xf32>
    %c0_14 = arith.constant 0 : index
    %c0_15 = arith.constant 0 : index
    %14 = vector.load %arg7[%c0_14, %c0_15] : memref<8x128xf32, #tpu.memory_space<vmem>>, vector<8x128xf32>
    %c0_i32_16 = arith.constant 0 : i32
    %15 = arith.index_cast %c0_i32_16 : i32 to index
    %c0_17 = arith.constant 0 : index
    %c0_18 = arith.constant 0 : index
    %16 = vector.load %arg8[%15, %c0_17, %c0_18] : memref<4x8x512xf32, #tpu.memory_space<vmem>>, vector<1x8x512xf32>
    %17 = vector.shape_cast %16 : vector<1x8x512xf32> to vector<8x512xf32>
    %cst_19 = arith.constant dense<0.000000e+00> : vector<8x512xf32>
    %18 = tpu.matmul %13, %12, %cst_19 {dimension_numbers = #tpu.dot_dimension_numbers<[1], [0], [0], [1], [0, 0, 1, 1], [], []>} : vector<8x128xf32>, vector<128x512xf32>, vector<8x512xf32> -> vector<8x512xf32>
    %19 = arith.addf %17, %18 : vector<8x512xf32>
    %20 = vector.extract_strided_slice %19 {offsets = [0, 0], sizes = [8, 128], strides = [1, 1]} : vector<8x512xf32> to vector<8x128xf32>
    %21 = arith.negf %20 : vector<8x128xf32>
    %22 = math.exp %21 : vector<8x128xf32>
    %cst_20 = arith.constant 1.000000e+00 : f32
    %23 = vector.broadcast %cst_20 : f32 to vector<8x128xf32>
    %24 = arith.addf %23, %22 : vector<8x128xf32>
    %25 = arith.divf %23, %24 : vector<8x128xf32>
    %26 = vector.extract_strided_slice %19 {offsets = [0, 128], sizes = [8, 128], strides = [1, 1]} : vector<8x512xf32> to vector<8x128xf32>
    %27 = arith.negf %26 : vector<8x128xf32>
    %28 = math.exp %27 : vector<8x128xf32>
    %cst_21 = arith.constant 1.000000e+00 : f32
    %29 = vector.broadcast %cst_21 : f32 to vector<8x128xf32>
    %30 = arith.addf %29, %28 : vector<8x128xf32>
    %31 = arith.divf %29, %30 : vector<8x128xf32>
    %32 = vector.extract_strided_slice %19 {offsets = [0, 256], sizes = [8, 128], strides = [1, 1]} : vector<8x512xf32> to vector<8x128xf32>
    %33 = math.tanh %32 : vector<8x128xf32>
    %34 = vector.extract_strided_slice %19 {offsets = [0, 384], sizes = [8, 128], strides = [1, 1]} : vector<8x512xf32> to vector<8x128xf32>
    %35 = arith.negf %34 : vector<8x128xf32>
    %36 = math.exp %35 : vector<8x128xf32>
    %cst_22 = arith.constant 1.000000e+00 : f32
    %37 = vector.broadcast %cst_22 : f32 to vector<8x128xf32>
    %38 = arith.addf %37, %36 : vector<8x128xf32>
    %39 = arith.divf %37, %38 : vector<8x128xf32>
    %40 = arith.mulf %31, %14 : vector<8x128xf32>
    %41 = arith.mulf %25, %33 : vector<8x128xf32>
    %42 = arith.addf %40, %41 : vector<8x128xf32>
    %43 = math.tanh %42 : vector<8x128xf32>
    %44 = arith.mulf %39, %43 : vector<8x128xf32>
    %c1_i32 = arith.constant 1 : i32
    %45 = arith.index_cast %c1_i32 : i32 to index
    %c0_23 = arith.constant 0 : index
    %c0_24 = arith.constant 0 : index
    %46 = vector.load %arg8[%45, %c0_23, %c0_24] : memref<4x8x512xf32, #tpu.memory_space<vmem>>, vector<1x8x512xf32>
    %47 = vector.shape_cast %46 : vector<1x8x512xf32> to vector<8x512xf32>
    %cst_25 = arith.constant dense<0.000000e+00> : vector<8x512xf32>
    %48 = tpu.matmul %44, %12, %cst_25 {dimension_numbers = #tpu.dot_dimension_numbers<[1], [0], [0], [1], [0, 0, 1, 1], [], []>} : vector<8x128xf32>, vector<128x512xf32>, vector<8x512xf32> -> vector<8x512xf32>
    %49 = arith.addf %47, %48 : vector<8x512xf32>
    %50 = vector.extract_strided_slice %49 {offsets = [0, 0], sizes = [8, 128], strides = [1, 1]} : vector<8x512xf32> to vector<8x128xf32>
    %51 = arith.negf %50 : vector<8x128xf32>
    %52 = math.exp %51 : vector<8x128xf32>
    %cst_26 = arith.constant 1.000000e+00 : f32
    %53 = vector.broadcast %cst_26 : f32 to vector<8x128xf32>
    %54 = arith.addf %53, %52 : vector<8x128xf32>
    %55 = arith.divf %53, %54 : vector<8x128xf32>
    %56 = vector.extract_strided_slice %49 {offsets = [0, 128], sizes = [8, 128], strides = [1, 1]} : vector<8x512xf32> to vector<8x128xf32>
    %57 = arith.negf %56 : vector<8x128xf32>
    %58 = math.exp %57 : vector<8x128xf32>
    %cst_27 = arith.constant 1.000000e+00 : f32
    %59 = vector.broadcast %cst_27 : f32 to vector<8x128xf32>
    %60 = arith.addf %59, %58 : vector<8x128xf32>
    %61 = arith.divf %59, %60 : vector<8x128xf32>
    %62 = vector.extract_strided_slice %49 {offsets = [0, 256], sizes = [8, 128], strides = [1, 1]} : vector<8x512xf32> to vector<8x128xf32>
    %63 = math.tanh %62 : vector<8x128xf32>
    %64 = vector.extract_strided_slice %49 {offsets = [0, 384], sizes = [8, 128], strides = [1, 1]} : vector<8x512xf32> to vector<8x128xf32>
    %65 = arith.negf %64 : vector<8x128xf32>
    %66 = math.exp %65 : vector<8x128xf32>
    %cst_28 = arith.constant 1.000000e+00 : f32
    %67 = vector.broadcast %cst_28 : f32 to vector<8x128xf32>
    %68 = arith.addf %67, %66 : vector<8x128xf32>
    %69 = arith.divf %67, %68 : vector<8x128xf32>
    %70 = arith.mulf %61, %42 : vector<8x128xf32>
    %71 = arith.mulf %55, %63 : vector<8x128xf32>
    %72 = arith.addf %70, %71 : vector<8x128xf32>
    %73 = math.tanh %72 : vector<8x128xf32>
    %74 = arith.mulf %69, %73 : vector<8x128xf32>
    %c2_i32 = arith.constant 2 : i32
    %75 = arith.index_cast %c2_i32 : i32 to index
    %c0_29 = arith.constant 0 : index
    %c0_30 = arith.constant 0 : index
    %76 = vector.load %arg8[%75, %c0_29, %c0_30] : memref<4x8x512xf32, #tpu.memory_space<vmem>>, vector<1x8x512xf32>
    %77 = vector.shape_cast %76 : vector<1x8x512xf32> to vector<8x512xf32>
    %cst_31 = arith.constant dense<0.000000e+00> : vector<8x512xf32>
    %78 = tpu.matmul %74, %12, %cst_31 {dimension_numbers = #tpu.dot_dimension_numbers<[1], [0], [0], [1], [0, 0, 1, 1], [], []>} : vector<8x128xf32>, vector<128x512xf32>, vector<8x512xf32> -> vector<8x512xf32>
    %79 = arith.addf %77, %78 : vector<8x512xf32>
    %80 = vector.extract_strided_slice %79 {offsets = [0, 0], sizes = [8, 128], strides = [1, 1]} : vector<8x512xf32> to vector<8x128xf32>
    %81 = arith.negf %80 : vector<8x128xf32>
    %82 = math.exp %81 : vector<8x128xf32>
    %cst_32 = arith.constant 1.000000e+00 : f32
    %83 = vector.broadcast %cst_32 : f32 to vector<8x128xf32>
    %84 = arith.addf %83, %82 : vector<8x128xf32>
    %85 = arith.divf %83, %84 : vector<8x128xf32>
    %86 = vector.extract_strided_slice %79 {offsets = [0, 128], sizes = [8, 128], strides = [1, 1]} : vector<8x512xf32> to vector<8x128xf32>
    %87 = arith.negf %86 : vector<8x128xf32>
    %88 = math.exp %87 : vector<8x128xf32>
    %cst_33 = arith.constant 1.000000e+00 : f32
    %89 = vector.broadcast %cst_33 : f32 to vector<8x128xf32>
    %90 = arith.addf %89, %88 : vector<8x128xf32>
    %91 = arith.divf %89, %90 : vector<8x128xf32>
    %92 = vector.extract_strided_slice %79 {offsets = [0, 256], sizes = [8, 128], strides = [1, 1]} : vector<8x512xf32> to vector<8x128xf32>
    %93 = math.tanh %92 : vector<8x128xf32>
    %94 = vector.extract_strided_slice %79 {offsets = [0, 384], sizes = [8, 128], strides = [1, 1]} : vector<8x512xf32> to vector<8x128xf32>
    %95 = arith.negf %94 : vector<8x128xf32>
    %96 = math.exp %95 : vector<8x128xf32>
    %cst_34 = arith.constant 1.000000e+00 : f32
    %97 = vector.broadcast %cst_34 : f32 to vector<8x128xf32>
    %98 = arith.addf %97, %96 : vector<8x128xf32>
    %99 = arith.divf %97, %98 : vector<8x128xf32>
    %100 = arith.mulf %91, %72 : vector<8x128xf32>
    %101 = arith.mulf %85, %93 : vector<8x128xf32>
    %102 = arith.addf %100, %101 : vector<8x128xf32>
    %103 = math.tanh %102 : vector<8x128xf32>
    %104 = arith.mulf %99, %103 : vector<8x128xf32>
    %c3_i32 = arith.constant 3 : i32
    %105 = arith.index_cast %c3_i32 : i32 to index
    %c0_35 = arith.constant 0 : index
    %c0_36 = arith.constant 0 : index
    %106 = vector.load %arg8[%105, %c0_35, %c0_36] : memref<4x8x512xf32, #tpu.memory_space<vmem>>, vector<1x8x512xf32>
    %107 = vector.shape_cast %106 : vector<1x8x512xf32> to vector<8x512xf32>
    %cst_37 = arith.constant dense<0.000000e+00> : vector<8x512xf32>
    %108 = tpu.matmul %104, %12, %cst_37 {dimension_numbers = #tpu.dot_dimension_numbers<[1], [0], [0], [1], [0, 0, 1, 1], [], []>} : vector<8x128xf32>, vector<128x512xf32>, vector<8x512xf32> -> vector<8x512xf32>
    %109 = arith.addf %107, %108 : vector<8x512xf32>
    %110 = vector.extract_strided_slice %109 {offsets = [0, 0], sizes = [8, 128], strides = [1, 1]} : vector<8x512xf32> to vector<8x128xf32>
    %111 = arith.negf %110 : vector<8x128xf32>
    %112 = math.exp %111 : vector<8x128xf32>
    %cst_38 = arith.constant 1.000000e+00 : f32
    %113 = vector.broadcast %cst_38 : f32 to vector<8x128xf32>
    %114 = arith.addf %113, %112 : vector<8x128xf32>
    %115 = arith.divf %113, %114 : vector<8x128xf32>
    %116 = vector.extract_strided_slice %109 {offsets = [0, 128], sizes = [8, 128], strides = [1, 1]} : vector<8x512xf32> to vector<8x128xf32>
    %117 = arith.negf %116 : vector<8x128xf32>
    %118 = math.exp %117 : vector<8x128xf32>
    %cst_39 = arith.constant 1.000000e+00 : f32
    %119 = vector.broadcast %cst_39 : f32 to vector<8x128xf32>
    %120 = arith.addf %119, %118 : vector<8x128xf32>
    %121 = arith.divf %119, %120 : vector<8x128xf32>
    %122 = vector.extract_strided_slice %109 {offsets = [0, 256], sizes = [8, 128], strides = [1, 1]} : vector<8x512xf32> to vector<8x128xf32>
    %123 = math.tanh %122 : vector<8x128xf32>
    %124 = vector.extract_strided_slice %109 {offsets = [0, 384], sizes = [8, 128], strides = [1, 1]} : vector<8x512xf32> to vector<8x128xf32>
    %125 = arith.negf %124 : vector<8x128xf32>
    %126 = math.exp %125 : vector<8x128xf32>
    %cst_40 = arith.constant 1.000000e+00 : f32
    %127 = vector.broadcast %cst_40 : f32 to vector<8x128xf32>
    %128 = arith.addf %127, %126 : vector<8x128xf32>
    %129 = arith.divf %127, %128 : vector<8x128xf32>
    %130 = arith.mulf %121, %102 : vector<8x128xf32>
    %131 = arith.mulf %115, %123 : vector<8x128xf32>
    %132 = arith.addf %130, %131 : vector<8x128xf32>
    %133 = math.tanh %132 : vector<8x128xf32>
    %134 = arith.mulf %129, %133 : vector<8x128xf32>
    %c4_i32 = arith.constant 4 : i32
    %c0_41 = arith.constant 0 : index
    %c0_42 = arith.constant 0 : index
    %135 = vector.load %arg6[%c0_41, %c0_42] : memref<8x128xf32, #tpu.memory_space<vmem>>, vector<8x128xf32>
    tpu.vector_store %arg6[%c0_41, %c0_42], %134 {strides = array<i32>} : memref<8x128xf32, #tpu.memory_space<vmem>>, vector<8x128xf32>,
    %c0_43 = arith.constant 0 : index
    %c0_44 = arith.constant 0 : index
    %136 = vector.load %arg7[%c0_43, %c0_44] : memref<8x128xf32, #tpu.memory_space<vmem>>, vector<8x128xf32>
    tpu.vector_store %arg7[%c0_43, %c0_44], %132 {strides = array<i32>} : memref<8x128xf32, #tpu.memory_space<vmem>>, vector<8x128xf32>,
    %c1_i32_45 = arith.constant 1 : i32
    %137 = arith.cmpi eq, %arg0, %c1_i32_45 : i32
    %138 = arith.extui %137 : i1 to i32
    %c0_i32_46 = arith.constant 0 : i32
    %139 = arith.cmpi ne, %138, %c0_i32_46 : i32
    scf.if %139 {
      %c0_47 = arith.constant 0 : index
      %c0_48 = arith.constant 0 : index
      %140 = vector.load %arg5[%c0_47, %c0_48] : memref<8x128xf32, #tpu.memory_space<vmem>>, vector<8x128xf32>
      tpu.vector_store %arg5[%c0_47, %c0_48], %134 {strides = array<i32>} : memref<8x128xf32, #tpu.memory_space<vmem>>, vector<8x128xf32>,
    } else {
    }
    return
  }
  func.func @transform_0(%arg0: i32) -> (i32, i32, i32) {
    %c0_i32 = arith.constant 0 : i32
    %c0_i32_0 = arith.constant 0 : i32
    %c0_i32_1 = arith.constant 0 : i32
    return %arg0, %c0_i32, %c0_i32_0 : i32, i32, i32
  }
  func.func @transform_1(%arg0: i32) -> (i32, i32) {
    %c0_i32 = arith.constant 0 : i32
    %c0_i32_0 = arith.constant 0 : i32
    %c0_i32_1 = arith.constant 0 : i32
    return %c0_i32, %c0_i32_0 : i32, i32
  }
  func.func @transform_2(%arg0: i32) -> (i32, i32) {
    %c0_i32 = arith.constant 0 : i32
    %c0_i32_0 = arith.constant 0 : i32
    %c0_i32_1 = arith.constant 0 : i32
    return %c0_i32, %c0_i32_0 : i32, i32
  }
  func.func @transform_3(%arg0: i32) -> (i32, i32) {
    %c0_i32 = arith.constant 0 : i32
    %c0_i32_0 = arith.constant 0 : i32
    %c0_i32_1 = arith.constant 0 : i32
    return %c0_i32, %c0_i32_0 : i32, i32
  }
  func.func @transform_4(%arg0: i32) -> (i32, i32) {
    %c0_i32 = arith.constant 0 : i32
    %c0_i32_0 = arith.constant 0 : i32
    %c0_i32_1 = arith.constant 0 : i32
    return %c0_i32, %c0_i32_0 : i32, i32
  }
}

</mosaic_0001>

<llo_original>
// kernel: tpu_custom_call.1
$region0: #{tpu_custom_call.1}
  #allocation0 [shape = 'u32[]', space=smem, size = 0x4, offset = 0x4, fixed_abs, tag = 'smem constant byte address 0x4 - core index']
  #allocation1 [shape = 'u32[144,128]{1,0:T(1,128)}', space=vmem, size = 0x12000, scoped, tag = 'internal scratch']
  #allocation2 [shape = 'f32[8,128]{1,0:T(8,128)}', space=vmem, size = 0x1000, scoped, tag = 'scratch operand']
  #allocation3 [shape = 'f32[8,128]{1,0:T(8,128)}', space=vmem, size = 0x1000, scoped, tag = 'scratch operand']
  #allocation4 [shape = 'f32[4,8,512]{2,1,0:T(8,128)}', space=vmem, size = 0x10000, scoped, tag = 'scratch operand']
  %s0 = inlined_call_operand.hbm [shape: f32[8,8,16], index: 0, kind: input, shape index: {}]
  %s1 = inlined_call_operand.hbm [shape: f32[16,512], index: 1, kind: input, shape index: {}]
  %s2 = inlined_call_operand.hbm [shape: f32[128,512], index: 2, kind: input, shape index: {}]
  %s3 = inlined_call_operand.vmem [shape: f32[1,512], index: 3, kind: input, shape index: {}]
  %s4 = inlined_call_operand.hbm [shape: f32[8,128], index: 4, kind: output, shape index: {}]
  %s5 = sld [smem:[#allocation0]]
  $region69: #{tpu_custom_call.1} parent=0
    _
  %s7 = ssub.s32 1, %s5
  %s8 = scalar_select 0, %s7, %s5
  $region1: #{tpu_custom_call.1} parent=0
    #allocation5 [shape = 'u8[32768]{0}', space=vmem, size = 0x8000, scoped, tag = 'input window, operand 0']
    #allocation6 [shape = 's32[2]{0}', space=sflag, size = 0x8, scoped, tag = 'scoped memory for tpu_custom_call.1']
    #allocation7 [shape = 's32[2]{0}', space=sflag, size = 0x8, scoped, tag = 'scoped memory for tpu_custom_call.1']
    #allocation8 [shape = 'u8[32768]{0}', space=vmem, size = 0x8000, scoped, tag = 'input window, operand 1, single buffered']
    #allocation9 [shape = 's32[1]{0}', space=sflag, size = 0x4, scoped, tag = 'scoped memory for tpu_custom_call.1']
    #allocation10 [shape = 'u8[262144]{0}', space=vmem, size = 0x40000, scoped, tag = 'input window, operand 2, single buffered']
    #allocation11 [shape = 'u8[4096]{0}', space=vmem, size = 0x1000, scoped, tag = 'output window, operand 0, single buffered']
    %9 = vsyncpa [#allocation6], 0
    %s10 = scalar_lea.sflag [#allocation6], 1
    %11 = vsyncpa %s10, 0
    %12 = vsyncpa [#allocation9], 0
    %13 = vsyncpa [#allocation7], 0
    loop: start=0, step=1, limit=4
    $region2: #{tpu_custom_call.1} parent=1 // loop_pre_header
      _
    $region3: #{tpu_custom_call.1} parent=1 // loop_header
      %s15 = sphi 0, %s19
      %p16 = scmp.ge.s32.totalorder %s15, 4
      %s25 = sphi 0, %s27
      %s28 = sphi 0, %s25
      %s29 = sphi 0, %s28
      %s45 = sphi 0, %s29
      %s49 = sphi 0, %s49
      %s51 = sphi 0, %s49
      %s52 = sphi 0, %s51
      %s66 = sphi 0, %s52
      %s70 = sphi 0, %s70
      %s72 = sphi 0, %s70
      %s73 = sphi 0, %s72
      %s87 = sphi 0, %s73
      %s91 = sphi 0, %s91
      %s93 = sphi 0, %s91
      %s94 = sphi 0, %s93
      %s108 = sphi 0, %s94
      %s112 = sphi 0, %s112
      %s114 = sphi 0, %s112
      %s115 = sphi 0, %s114
      %s129 = sphi 0, %s115
    $region4: #{tpu_custom_call.1} parent=1 // loop_header_branch
      %18 = sbr.rel (%p16) target = $region8
    $region5: #{tpu_custom_call.1} parent=1 // loop_body
      %s20 = ssub.s32 %s15, 1
      %s21 = ssub.s32 %s15, 2
      %s22 = sadd.s32 %s15, 1
      %s23 = ssub.s32 %s15, %s22
      %p24 = scmp.eq.s32.totalorder %s23, 0
      %s26 = sadd.s32 %s25, 1
      %s27 = scalar_select %p24, %s25, %s26
      %p30 = pneg %p24
      %p31 = scmp.eq.s32.totalorder %s15, 1
      %p32 = por %p30, %p31
      %p33 = scmp.ne.s32.totalorder %s25, %s28
      %p34 = scmp.eq.s32.totalorder %s15, 0
      %p35 = por %p33, %p34
      %p36 = scmp.ne.s32.totalorder %s25, %s28
      %p37 = scmp.eq.s32.totalorder %s20, 1
      %p38 = por %p36, %p37
      %p39 = scmp.ne.s32.totalorder %s28, %s29
      %p40 = scmp.eq.s32.totalorder %s20, 0
      %p41 = por %p39, %p40
      %p42 = scmp.ne.s32.totalorder %s28, %s29
      %p43 = scmp.eq.s32.totalorder %s21, 1
      %p44 = por %p42, %p43
      %p46 = scmp.ne.s32.totalorder %s29, %s45
      %p47 = scmp.eq.s32.totalorder %s21, 0
      %p48 = por %p46, %p47
      %s50 = sadd.s32 %s49, 1
      %p53 = scmp.eq.s32.totalorder %s15, 1
      %p54 = scmp.ne.s32.totalorder %s49, %s51
      %p55 = scmp.eq.s32.totalorder %s15, 0
      %p56 = por %p54, %p55
      %p57 = scmp.ne.s32.totalorder %s49, %s51
      %p58 = scmp.eq.s32.totalorder %s20, 1
      %p59 = por %p57, %p58
      %p60 = scmp.ne.s32.totalorder %s51, %s52
      %p61 = scmp.eq.s32.totalorder %s20, 0
      %p62 = por %p60, %p61
      %p63 = scmp.ne.s32.totalorder %s51, %s52
      %p64 = scmp.eq.s32.totalorder %s21, 1
      %p65 = por %p63, %p64
      %p67 = scmp.ne.s32.totalorder %s52, %s66
      %p68 = scmp.eq.s32.totalorder %s21, 0
      %p69 = por %p67, %p68
      %s71 = sadd.s32 %s70, 1
      %p74 = scmp.eq.s32.totalorder %s15, 1
      %p75 = scmp.ne.s32.totalorder %s70, %s72
      %p76 = scmp.eq.s32.totalorder %s15, 0
      %p77 = por %p75, %p76
      %p78 = scmp.ne.s32.totalorder %s70, %s72
      %p79 = scmp.eq.s32.totalorder %s20, 1
      %p80 = por %p78, %p79
      %p81 = scmp.ne.s32.totalorder %s72, %s73
      %p82 = scmp.eq.s32.totalorder %s20, 0
      %p83 = por %p81, %p82
      %p84 = scmp.ne.s32.totalorder %s72, %s73
      %p85 = scmp.eq.s32.totalorder %s21, 1
      %p86 = por %p84, %p85
      %p88 = scmp.ne.s32.totalorder %s73, %s87
      %p89 = scmp.eq.s32.totalorder %s21, 0
      %p90 = por %p88, %p89
      %s92 = sadd.s32 %s91, 1
      %p95 = scmp.eq.s32.totalorder %s15, 1
      %p96 = scmp.ne.s32.totalorder %s91, %s93
      %p97 = scmp.eq.s32.totalorder %s15, 0
      %p98 = por %p96, %p97
      %p99 = scmp.ne.s32.totalorder %s91, %s93
      %p100 = scmp.eq.s32.totalorder %s20, 1
      %p101 = por %p99, %p100
      %p102 = scmp.ne.s32.totalorder %s93, %s94
      %p103 = scmp.eq.s32.totalorder %s20, 0
      %p104 = por %p102, %p103
      %p105 = scmp.ne.s32.totalorder %s93, %s94
      %p106 = scmp.eq.s32.totalorder %s21, 1
      %p107 = por %p105, %p106
      %p109 = scmp.ne.s32.totalorder %s94, %s108
      %p110 = scmp.eq.s32.totalorder %s21, 0
      %p111 = por %p109, %p110
      %s113 = sadd.s32 %s112, 1
      %p116 = scmp.eq.s32.totalorder %s15, 1
      %p117 = scmp.ne.s32.totalorder %s112, %s114
      %p118 = scmp.eq.s32.totalorder %s15, 0
      %p119 = por %p117, %p118
      %p120 = scmp.ne.s32.totalorder %s112, %s114
      %p121 = scmp.eq.s32.totalorder %s20, 1
      %p122 = por %p120, %p121
      %p123 = scmp.ne.s32.totalorder %s114, %s115
      %p124 = scmp.eq.s32.totalorder %s20, 0
      %p125 = por %p123, %p124
      %p126 = scmp.ne.s32.totalorder %s114, %s115
      %p127 = scmp.eq.s32.totalorder %s21, 1
      %p128 = por %p126, %p127
      %p130 = scmp.ne.s32.totalorder %s115, %s129
      %p131 = scmp.eq.s32.totalorder %s21, 0
      %p132 = por %p130, %p131
      %p133 = scmp.le.s32.totalorder 1, %s15
      %p134 = scmp.lt.s32.totalorder %s15, 3
      %p135 = pnand %p133, %p134
      %p136 = pneg %p135
      // Predicated region
      $region9: #{tpu_custom_call.1} parent=5 // pred_check
        _
      $region10: #{tpu_custom_call.1} parent=5 // pred_check_branch
        %138 = sbr.rel (%p135) target = $region12
      $region11: #{tpu_custom_call.1} parent=5 // pred_region
        %s139 = ssub.s32 %s15, 1
        // Predicated region
        $region13: #{tpu_custom_call.1} parent=11 // pred_check
          %p140 = pneg %p62
        $region14: #{tpu_custom_call.1} parent=11 // pred_check_branch
          %142 = sbr.rel (%p140) target = $region16
        $region15: #{tpu_custom_call.1} parent=11 // pred_region
          %s144 = ssub.s32 1024, 1024
          %145 = vsyncadd [#allocation9], %s144
          %s146 = sshll.u32 [#allocation8], 4
          %s147 = int_to_ptr.vmem [resolvable:$true] %s146
          %152 = dma.hbm_to_vmem [thread:$0]  %s1, 1024, %s147, [#allocation9], 512, 512, 32
        $region16: #{tpu_custom_call.1} parent=11 // pred_fallthru
          _
        // Predicated region
        $region17: #{tpu_custom_call.1} parent=11 // pred_check
          %p153 = pneg %p83
        $region18: #{tpu_custom_call.1} parent=11 // pred_check_branch
          %155 = sbr.rel (%p153) target = $region20
        $region19: #{tpu_custom_call.1} parent=11 // pred_region
          %s157 = ssub.s32 8192, 8192
          %158 = vsyncadd [#allocation9], %s157
          %s159 = sshll.u32 [#allocation10], 4
          %s160 = int_to_ptr.vmem [resolvable:$true] %s159
          %165 = dma.hbm_to_vmem [thread:$0]  %s2, 8192, %s160, [#allocation9], 512, 512, 32
        $region20: #{tpu_custom_call.1} parent=11 // pred_fallthru
          _
        // Predicated region
        $region21: #{tpu_custom_call.1} parent=11 // pred_check
          %p166 = pneg %p104
        $region22: #{tpu_custom_call.1} parent=11 // pred_check_branch
          %168 = sbr.rel (%p166) target = $region24
        $region23: #{tpu_custom_call.1} parent=11 // pred_region
          _
        $region24: #{tpu_custom_call.1} parent=11 // pred_fallthru
          _
      $region12: #{tpu_custom_call.1} parent=5 // pred_fallthru
        _
      %p169 = scmp.lt.s32.totalorder %s15, 2
      // Predicated region
      $region25: #{tpu_custom_call.1} parent=5 // pred_check
        %p170 = pneg %p169
      $region26: #{tpu_custom_call.1} parent=5 // pred_check_branch
        %172 = sbr.rel (%p170) target = $region28
      $region27: #{tpu_custom_call.1} parent=5 // pred_region
        // Predicated region
        $region29: #{tpu_custom_call.1} parent=27 // pred_check
          %p173 = pneg %p35
        $region30: #{tpu_custom_call.1} parent=27 // pred_check_branch
          %175 = sbr.rel (%p173) target = $region32
        $region31: #{tpu_custom_call.1} parent=27 // pred_region
          %s176 = sand.u32 %s25, 1
          %s177 = scalar_lea.sflag [#allocation6], %s176
          %s178 = sand.u32 %s25, 1
          %s179 = smul.addr %s178, 32
          %s180 = scalar_lea.vmem [#allocation5], %s179
          %s181 = smul.u32 4, %s15
          %s183 = ssub.s32 512, 512
          %184 = vsyncadd %s177, %s183
          %s185 = smul.addr %s181, 128
          %s186 = scalar_lea.hbm %s0, %s185
          %s187 = sshll.u32 %s180, 4
          %s188 = int_to_ptr.vmem [resolvable:$true] %s187
          %193 = dma.hbm_to_vmem [thread:$0]  %s186, 512, %s188, %s177, 128, 128, 8
        $region32: #{tpu_custom_call.1} parent=27 // pred_fallthru
          _
      $region28: #{tpu_custom_call.1} parent=5 // pred_fallthru
        _
      %p194 = scmp.le.s32.totalorder 1, %s15
      %p195 = scmp.lt.s32.totalorder %s15, 3
      %p196 = pnand %p194, %p195
      %p197 = pneg %p196
      // Predicated region
      $region33: #{tpu_custom_call.1} parent=5 // pred_check
        _
      $region34: #{tpu_custom_call.1} parent=5 // pred_check_branch
        %199 = sbr.rel (%p196) target = $region36
      $region35: #{tpu_custom_call.1} parent=5 // pred_region
        %s200 = ssub.s32 %s15, 1
        %s201 = sand.u32 %s28, 1
        %s202 = scalar_lea.sflag [#allocation6], %s201
        %s203 = sand.u32 %s28, 1
        %s204 = smul.addr %s203, 32
        %s205 = scalar_lea.vmem [#allocation5], %s204
        // Predicated region
        $region37: #{tpu_custom_call.1} parent=35 // pred_check
          %p206 = pneg %p41
        $region38: #{tpu_custom_call.1} parent=35 // pred_check_branch
          %208 = sbr.rel (%p206) target = $region40
        $region39: #{tpu_custom_call.1} parent=35 // pred_region
          %209 = dma.done %s202, 512
        $region40: #{tpu_custom_call.1} parent=35 // pred_fallthru
          _
        // Predicated region
        $region41: #{tpu_custom_call.1} parent=35 // pred_check
          %p210 = pneg %p62
        $region42: #{tpu_custom_call.1} parent=35 // pred_check_branch
          %212 = sbr.rel (%p210) target = $region44
        $region43: #{tpu_custom_call.1} parent=35 // pred_region
          %213 = dma.done [#allocation9], 1024
        $region44: #{tpu_custom_call.1} parent=35 // pred_fallthru
          _
        // Predicated region
        $region45: #{tpu_custom_call.1} parent=35 // pred_check
          %p214 = pneg %p83
        $region46: #{tpu_custom_call.1} parent=35 // pred_check_branch
          %216 = sbr.rel (%p214) target = $region48
        $region47: #{tpu_custom_call.1} parent=35 // pred_region
          %217 = dma.done [#allocation9], 8192
        $region48: #{tpu_custom_call.1} parent=35 // pred_fallthru
          _
        %s218 = sand.u32 %s28, 1
        %s219 = scalar_lea.sflag [#allocation6], %s218
        %s220 = sand.u32 %s28, 1
        %s221 = smul.addr %s220, 32
        %s222 = scalar_lea.vmem [#allocation5], %s221
        %p223 = pneg %p41
        %p224 = pneg %p38
        %p225 = pneg %p62
        %p226 = pneg %p59
        %p227 = pneg %p83
        %p228 = pneg %p80
        %p229 = pneg %p104
        %p230 = pneg %p101
        %p231 = pneg %p125
        %p232 = pneg %p122
        %s233 = smul.u32 4, %s20
        %p234 = scmp.eq.s32.totalorder %s20, 0
        // Predicated region
        $region49: #{tpu_custom_call.1} parent=35 // pred_check
          %p235 = pneg %p234
        $region50: #{tpu_custom_call.1} parent=35 // pred_check_branch
          %237 = sbr.rel (%p235) target = $region52
        $region51: #{tpu_custom_call.1} parent=35 // pred_region
          %238 = vst [vmem:[#allocation2] sm:$0xff] 0.0
          %239 = vst [vmem:[#allocation3] sm:$0xff] 0.0
        $region52: #{tpu_custom_call.1} parent=35 // pred_fallthru
          _
        %v240 = vld [vmem:[%s205] sm:$0xff]
        %v241 = vld [vmem:[%s205 + $0x8] sm:$0xff]
        %v242 = vld [vmem:[%s205 + $0x10] sm:$0xff]
        %v243 = vld [vmem:[%s205 + $0x18] sm:$0xff]
        %v244 = vld [vmem:[#allocation8] sm:$0xff]
        %v245 = vld [vmem:[#allocation8 + $0x8] sm:$0xff]
        %v246 = vld [vmem:[#allocation8 + $0x10] sm:$0xff]
        %v247 = vld [vmem:[#allocation8 + $0x18] sm:$0xff]
        %v248 = vld [vmem:[#allocation8 + $0x20] sm:$0xff]
        %v249 = vld [vmem:[#allocation8 + $0x28] sm:$0xff]
        %v250 = vld [vmem:[#allocation8 + $0x30] sm:$0xff]
        %v251 = vld [vmem:[#allocation8 + $0x38] sm:$0xff]
        %v252 = vld [vmem:[%s3] sm:$0xf]
        %v254 = vlaneseq
        %v255 = vshrl.u32 %v254, 7
        %v256 = vsub.s32 0, %v255
        %v257 = vrot.slane %v252, %v256
        %v258 = vlaneseq
        %v259 = vshrl.u32 %v258, 7
        %v260 = vsub.s32 1, %v259
        %v261 = vrot.slane %v252, %v260
        %v262 = vlaneseq
        %v263 = vshrl.u32 %v262, 7
        %v264 = vsub.s32 2, %v263
        %v265 = vrot.slane %v252, %v264
        %v266 = vlaneseq
        %v267 = vshrl.u32 %v266, 7
        %v268 = vsub.s32 3, %v267
        %v269 = vrot.slane %v252, %v268
        %vm274 = vcmask 130048
        %v276 = vsel %vm274, %v240, 0
        %v279 = vsel %vm274, %v241, 0
        %v282 = vsel %vm274, %v242, 0
        %v285 = vsel %vm274, %v243, 0
        %287 = vmatprep.subr.mxu0 %v245
        %288 = vmatpush1.msra.mxu0 %v244
        %289 = vmatprep.subr.mxu0 %v249
        %290 = vmatpush1.msra.mxu0 %v248
        %291 = vmatprep.subr.mxu0 0.0
        %292 = vmatpush1.msra.mxu0 0.0
        %293 = vmatprep.subr.mxu0 0.0
        %294 = vmatpush1.msra.mxu0 0.0
        %295 = vmatprep.subr.mxu0 0.0
        %296 = vmatpush1.msra.mxu0 0.0
        %297 = vmatprep.subr.mxu0 0.0
        %298 = vmatpush1.msra.mxu0 0.0
        %299 = vmatprep.subr.mxu0 0.0
        %300 = vmatpush1.msra.mxu0 0.0
        %301 = vmatprep.subr.mxu0 0.0
        %302 = vmatpush1.msra.mxu0 0.0
        %303 = vmatprep.subr.mxu0 0.0
        %304 = vmatpush1.msra.mxu0 0.0
        %305 = vmatprep.subr.mxu0 0.0
        %306 = vmatpush1.msra.mxu0 0.0
        %307 = vmatprep.subr.mxu0 0.0
        %308 = vmatpush1.msra.mxu0 0.0
        %309 = vmatprep.subr.mxu0 0.0
        %310 = vmatpush1.msra.mxu0 0.0
        %311 = vmatprep.subr.mxu0 0.0
        %312 = vmatpush1.msra.mxu0 0.0
        %313 = vmatprep.subr.mxu0 0.0
        %314 = vmatpush1.msra.mxu0 0.0
        %315 = vmatprep.subr.mxu0 0.0
        %316 = vmatpush1.msra.mxu0 0.0
        %317 = vmatprep.subr.mxu0 0.0
        %318 = vmatpush1.msra.mxu0 0.0
        %319 = vmatprep.subr.mxu0 0.0
        %320 = vmatpush1.msra.mxu0 0.0
        %321 = vmatprep.subr.mxu0 0.0
        %322 = vmatpush1.msra.mxu0 0.0
        %323 = vmatprep.subr.mxu0 0.0
        %324 = vmatpush1.msra.mxu0 0.0
        %325 = vmatprep.subr.mxu0 0.0
        %326 = vmatpush1.msra.mxu0 0.0
        %327 = vmatprep.subr.mxu0 0.0
        %328 = vmatpush1.msra.mxu0 0.0
        %329 = vmatprep.subr.mxu0 0.0
        %330 = vmatpush1.msra.mxu0 0.0
        %331 = vmatprep.subr.mxu0 0.0
        %332 = vmatpush1.msra.mxu0 0.0
        %333 = vmatprep.subr.mxu0 0.0
        %334 = vmatpush1.msra.mxu0 0.0
        %335 = vmatprep.subr.mxu0 0.0
        %336 = vmatpush1.msra.mxu0 0.0
        %337 = vmatprep.subr.mxu0 0.0
        %338 = vmatpush1.msra.mxu0 0.0
        %339 = vmatprep.subr.mxu0 0.0
        %340 = vmatpush1.msra.mxu0 0.0
        %341 = vmatprep.subr.mxu0 0.0
        %342 = vmatpush1.msra.mxu0 0.0
        %343 = vmatprep.subr.mxu0 0.0
        %344 = vmatpush1.msra.mxu0 0.0
        %345 = vmatprep.subr.mxu0 0.0
        %346 = vmatpush1.msra.mxu0 0.0
        %347 = vmatprep.subr.mxu0 0.0
        %348 = vmatpush1.msra.mxu0 0.0
        %349 = vmatprep.subr.mxu0 0.0
        %350 = vmatpush1.msra.mxu0 0.0
        %351 = vmatprep.mubr.f32.mxu0 0.0
        %352 = vmatmul.mubr.f32.gmra.mrb[0].mxu0 %v276
        %v353 = vpop.f32.mrb[0].mxu0
        %v354 = vadd.f32 %v257, %v353
        %v355 = vpop.f32.mrb[0].mxu0
        %v356 = vadd.f32 %v261, %v355
        %357 = vmatprep.mubr.f32.mxu0 0.0
        %358 = vmatmul.mubr.f32.gmra.mrb[0].mxu0 %v279
        %v359 = vpop.f32.mrb[0].mxu0
        %v360 = vadd.f32 %v257, %v359
        %v361 = vpop.f32.mrb[0].mxu0
        %v362 = vadd.f32 %v261, %v361
        %363 = vmatprep.mubr.f32.mxu0 0.0
        %364 = vmatmul.mubr.f32.gmra.mrb[0].mxu0 %v282
        %v365 = vpop.f32.mrb[0].mxu0
        %v366 = vadd.f32 %v257, %v365
        %v367 = vpop.f32.mrb[0].mxu0
        %v368 = vadd.f32 %v261, %v367
        %369 = vmatprep.mubr.f32.mxu0 0.0
        %370 = vmatmul.mubr.f32.gmra.mrb[0].mxu0 %v285
        %v371 = vpop.f32.mrb[0].mxu0
        %v372 = vadd.f32 %v257, %v371
        %v373 = vpop.f32.mrb[0].mxu0
        %v374 = vadd.f32 %v261, %v373
        %375 = vdwg.mxu0
        %376 = vmatprep.subr.mxu0 %v247
        %377 = vmatpush1.msra.mxu0 %v246
        %378 = vmatprep.subr.mxu0 %v251
        %379 = vmatpush1.msra.mxu0 %v250
        %380 = vmatprep.subr.mxu0 0.0
        %381 = vmatpush1.msra.mxu0 0.0
        %382 = vmatprep.subr.mxu0 0.0
        %383 = vmatpush1.msra.mxu0 0.0
        %384 = vmatprep.subr.mxu0 0.0
        %385 = vmatpush1.msra.mxu0 0.0
        %386 = vmatprep.subr.mxu0 0.0
        %387 = vmatpush1.msra.mxu0 0.0
        %388 = vmatprep.subr.mxu0 0.0
        %389 = vmatpush1.msra.mxu0 0.0
        %390 = vmatprep.subr.mxu0 0.0
        %391 = vmatpush1.msra.mxu0 0.0
        %392 = vmatprep.subr.mxu0 0.0
        %393 = vmatpush1.msra.mxu0 0.0
        %394 = vmatprep.subr.mxu0 0.0
        %395 = vmatpush1.msra.mxu0 0.0
        %396 = vmatprep.subr.mxu0 0.0
        %397 = vmatpush1.msra.mxu0 0.0
        %398 = vmatprep.subr.mxu0 0.0
        %399 = vmatpush1.msra.mxu0 0.0
        %400 = vmatprep.subr.mxu0 0.0
        %401 = vmatpush1.msra.mxu0 0.0
        %402 = vmatprep.subr.mxu0 0.0
        %403 = vmatpush1.msra.mxu0 0.0
        %404 = vmatprep.subr.mxu0 0.0
        %405 = vmatpush1.msra.mxu0 0.0
        %406 = vmatprep.subr.mxu0 0.0
        %407 = vmatpush1.msra.mxu0 0.0
        %408 = vmatprep.subr.mxu0 0.0
        %409 = vmatpush1.msra.mxu0 0.0
        %410 = vmatprep.subr.mxu0 0.0
        %411 = vmatpush1.msra.mxu0 0.0
        %412 = vmatprep.subr.mxu0 0.0
        %413 = vmatpush1.msra.mxu0 0.0
        %414 = vmatprep.subr.mxu0 0.0
        %415 = vmatpush1.msra.mxu0 0.0
        %416 = vmatprep.subr.mxu0 0.0
        %417 = vmatpush1.msra.mxu0 0.0
        %418 = vmatprep.subr.mxu0 0.0
        %419 = vmatpush1.msra.mxu0 0.0
        %420 = vmatprep.subr.mxu0 0.0
        %421 = vmatpush1.msra.mxu0 0.0
        %422 = vmatprep.subr.mxu0 0.0
        %423 = vmatpush1.msra.mxu0 0.0
        %424 = vmatprep.subr.mxu0 0.0
        %425 = vmatpush1.msra.mxu0 0.0
        %426 = vmatprep.subr.mxu0 0.0
        %427 = vmatpush1.msra.mxu0 0.0
        %428 = vmatprep.subr.mxu0 0.0
        %429 = vmatpush1.msra.mxu0 0.0
        %430 = vmatprep.subr.mxu0 0.0
        %431 = vmatpush1.msra.mxu0 0.0
        %432 = vmatprep.subr.mxu0 0.0
        %433 = vmatpush1.msra.mxu0 0.0
        %434 = vmatprep.subr.mxu0 0.0
        %435 = vmatpush1.msra.mxu0 0.0
        %436 = vmatprep.subr.mxu0 0.0
        %437 = vmatpush1.msra.mxu0 0.0
        %438 = vmatprep.subr.mxu0 0.0
        %439 = vmatpush1.msra.mxu0 0.0
        %440 = vmatprep.mubr.f32.mxu0 0.0
        %441 = vmatmul.mubr.f32.gmra.mrb[0].mxu0 %v276
        %v442 = vpop.f32.mrb[0].mxu0
        %v443 = vadd.f32 %v265, %v442
        %v444 = vpop.f32.mrb[0].mxu0
        %v445 = vadd.f32 %v269, %v444
        %446 = vmatprep.mubr.f32.mxu0 0.0
        %447 = vmatmul.mubr.f32.gmra.mrb[0].mxu0 %v279
        %v448 = vpop.f32.mrb[0].mxu0
        %v449 = vadd.f32 %v265, %v448
        %v450 = vpop.f32.mrb[0].mxu0
        %v451 = vadd.f32 %v269, %v450
        %452 = vmatprep.mubr.f32.mxu0 0.0
        %453 = vmatmul.mubr.f32.gmra.mrb[0].mxu0 %v282
        %v454 = vpop.f32.mrb[0].mxu0
        %v455 = vadd.f32 %v265, %v454
        %v456 = vpop.f32.mrb[0].mxu0
        %v457 = vadd.f32 %v269, %v456
        %458 = vmatprep.mubr.f32.mxu0 0.0
        %459 = vmatmul.mubr.f32.gmra.mrb[0].mxu0 %v285
        %v460 = vpop.f32.mrb[0].mxu0
        %v461 = vadd.f32 %v265, %v460
        %v462 = vpop.f32.mrb[0].mxu0
        %v463 = vadd.f32 %v269, %v462
        %464 = vdwg.mxu0
        %465 = vst [vmem:[#allocation4] sm:$0xff] %v354
        %466 = vst [vmem:[#allocation4 + $0x8] sm:$0xff] %v356
        %467 = vst [vmem:[#allocation4 + $0x10] sm:$0xff] %v443
        %468 = vst [vmem:[#allocation4 + $0x18] sm:$0xff] %v445
        %469 = vst [vmem:[#allocation4 + $0x20] sm:$0xff] %v360
        %470 = vst [vmem:[#allocation4 + $0x28] sm:$0xff] %v362
        %471 = vst [vmem:[#allocation4 + $0x30] sm:$0xff] %v449
        %472 = vst [vmem:[#allocation4 + $0x38] sm:$0xff] %v451
        %473 = vst [vmem:[#allocation4 + $0x40] sm:$0xff] %v366
        %474 = vst [vmem:[#allocation4 + $0x48] sm:$0xff] %v368
        %475 = vst [vmem:[#allocation4 + $0x50] sm:$0xff] %v455
        %476 = vst [vmem:[#allocation4 + $0x58] sm:$0xff] %v457
        %477 = vst [vmem:[#allocation4 + $0x60] sm:$0xff] %v372
        %478 = vst [vmem:[#allocation4 + $0x68] sm:$0xff] %v374
        %479 = vst [vmem:[#allocation4 + $0x70] sm:$0xff] %v461
        %480 = vst [vmem:[#allocation4 + $0x78] sm:$0xff] %v463
        %v481 = vld [vmem:[#allocation10] sm:$0xff]
        %v482 = vld [vmem:[#allocation10 + $0x8] sm:$0xff]
        %v483 = vld [vmem:[#allocation10 + $0x10] sm:$0xff]
        %v484 = vld [vmem:[#allocation10 + $0x18] sm:$0xff]
        %v485 = vld [vmem:[#allocation10 + $0x20] sm:$0xff]
        %v486 = vld [vmem:[#allocation10 + $0x28] sm:$0xff]
        %v487 = vld [vmem:[#allocation10 + $0x30] sm:$0xff]
        %v488 = vld [vmem:[#allocation10 + $0x38] sm:$0xff]
        %v489 = vld [vmem:[#allocation10 + $0x40] sm:$0xff]
        %v490 = vld [vmem:[#allocation10 + $0x48] sm:$0xff]
        %v491 = vld [vmem:[#allocation10 + $0x50] sm:$0xff]
        %v492 = vld [vmem:[#allocation10 + $0x58] sm:$0xff]
        %v493 = vld [vmem:[#allocation10 + $0x60] sm:$0xff]
        %v494 = vld [vmem:[#allocation10 + $0x68] sm:$0xff]
        %v495 = vld [vmem:[#allocation10 + $0x70] sm:$0xff]
        %v496 = vld [vmem:[#allocation10 + $0x78] sm:$0xff]
        %v497 = vld [vmem:[#allocation10 + $0x80] sm:$0xff]
        %v498 = vld [vmem:[#allocation10 + $0x88] sm:$0xff]
        %v499 = vld [vmem:[#allocation10 + $0x90] sm:$0xff]
        %v500 = vld [vmem:[#allocation10 + $0x98] sm:$0xff]
        %v501 = vld [vmem:[#allocation10 + $0xa0] sm:$0xff]
        %v502 = vld [vmem:[#allocation10 + $0xa8] sm:$0xff]
        %v503 = vld [vmem:[#allocation10 + $0xb0] sm:$0xff]
        %v504 = vld [vmem:[#allocation10 + $0xb8] sm:$0xff]
        %v505 = vld [vmem:[#allocation10 + $0xc0] sm:$0xff]
        %v506 = vld [vmem:[#allocation10 + $0xc8] sm:$0xff]
        %v507 = vld [vmem:[#allocation10 + $0xd0] sm:$0xff]
        %v508 = vld [vmem:[#allocation10 + $0xd8] sm:$0xff]
        %v509 = vld [vmem:[#allocation10 + $0xe0] sm:$0xff]
        %v510 = vld [vmem:[#allocation10 + $0xe8] sm:$0xff]
        %v511 = vld [vmem:[#allocation10 + $0xf0] sm:$0xff]
        %v512 = vld [vmem:[#allocation10 + $0xf8] sm:$0xff]
        %v513 = vld [vmem:[#allocation10 + $0x100] sm:$0xff]
        %v514 = vld [vmem:[#allocation10 + $0x108] sm:$0xff]
        %v515 = vld [vmem:[#allocation10 + $0x110] sm:$0xff]
        %v516 = vld [vmem:[#allocation10 + $0x118] sm:$0xff]
        %v517 = vld [vmem:[#allocation10 + $0x120] sm:$0xff]
        %v518 = vld [vmem:[#allocation10 + $0x128] sm:$0xff]
        %v519 = vld [vmem:[#allocation10 + $0x130] sm:$0xff]
        %v520 = vld [vmem:[#allocation10 + $0x138] sm:$0xff]
        %v521 = vld [vmem:[#allocation10 + $0x140] sm:$0xff]
        %v522 = vld [vmem:[#allocation10 + $0x148] sm:$0xff]
        %v523 = vld [vmem:[#allocation10 + $0x150] sm:$0xff]
        %v524 = vld [vmem:[#allocation10 + $0x158] sm:$0xff]
        %v525 = vld [vmem:[#allocation10 + $0x160] sm:$0xff]
        %v526 = vld [vmem:[#allocation10 + $0x168] sm:$0xff]
        %v527 = vld [vmem:[#allocation10 + $0x170] sm:$0xff]
        %v528 = vld [vmem:[#allocation10 + $0x178] sm:$0xff]
        %v529 = vld [vmem:[#allocation10 + $0x180] sm:$0xff]
        %v530 = vld [vmem:[#allocation10 + $0x188] sm:$0xff]
        %v531 = vld [vmem:[#allocation10 + $0x190] sm:$0xff]
        %v532 = vld [vmem:[#allocation10 + $0x198] sm:$0xff]
        %v533 = vld [vmem:[#allocation10 + $0x1a0] sm:$0xff]
        %v534 = vld [vmem:[#allocation10 + $0x1a8] sm:$0xff]
        %v535 = vld [vmem:[#allocation10 + $0x1b0] sm:$0xff]
        %v536 = vld [vmem:[#allocation10 + $0x1b8] sm:$0xff]
        %v537 = vld [vmem:[#allocation10 + $0x1c0] sm:$0xff]
        %v538 = vld [vmem:[#allocation10 + $0x1c8] sm:$0xff]
        %v539 = vld [vmem:[#allocation10 + $0x1d0] sm:$0xff]
        %v540 = vld [vmem:[#allocation10 + $0x1d8] sm:$0xff]
        %v541 = vld [vmem:[#allocation10 + $0x1e0] sm:$0xff]
        %v542 = vld [vmem:[#allocation10 + $0x1e8] sm:$0xff]
        %v543 = vld [vmem:[#allocation10 + $0x1f0] sm:$0xff]
        %v544 = vld [vmem:[#allocation10 + $0x1f8] sm:$0xff]
        %v545 = vld [vmem:[#allocation2] sm:$0xff]
        %v546 = vld [vmem:[#allocation3] sm:$0xff]
        %v547 = vld [vmem:[#allocation4] sm:$0xff]
        %v548 = vld [vmem:[#allocation4 + $0x8] sm:$0xff]
        %v549 = vld [vmem:[#allocation4 + $0x10] sm:$0xff]
        %v550 = vld [vmem:[#allocation4 + $0x18] sm:$0xff]
        %551 = vmatprep.subr.mxu0 %v482
        %552 = vmatpush1.msra.mxu0 %v481
        %553 = vmatprep.subr.mxu0 %v486
        %554 = vmatpush1.msra.mxu0 %v485
        %555 = vmatprep.subr.mxu0 %v490
        %556 = vmatpush1.msra.mxu0 %v489
        %557 = vmatprep.subr.mxu0 %v494
        %558 = vmatpush1.msra.mxu0 %v493
        %559 = vmatprep.subr.mxu0 %v498
        %560 = vmatpush1.msra.mxu0 %v497
        %561 = vmatprep.subr.mxu0 %v502
        %562 = vmatpush1.msra.mxu0 %v501
        %563 = vmatprep.subr.mxu0 %v506
        %564 = vmatpush1.msra.mxu0 %v505
        %565 = vmatprep.subr.mxu0 %v510
        %566 = vmatpush1.msra.mxu0 %v509
        %567 = vmatprep.subr.mxu0 %v514
        %568 = vmatpush1.msra.mxu0 %v513
        %569 = vmatprep.subr.mxu0 %v518
        %570 = vmatpush1.msra.mxu0 %v517
        %571 = vmatprep.subr.mxu0 %v522
        %572 = vmatpush1.msra.mxu0 %v521
        %573 = vmatprep.subr.mxu0 %v526
        %574 = vmatpush1.msra.mxu0 %v525
        %575 = vmatprep.subr.mxu0 %v530
        %576 = vmatpush1.msra.mxu0 %v529
        %577 = vmatprep.subr.mxu0 %v534
        %578 = vmatpush1.msra.mxu0 %v533
        %579 = vmatprep.subr.mxu0 %v538
        %580 = vmatpush1.msra.mxu0 %v537
        %581 = vmatprep.subr.mxu0 %v542
        %582 = vmatpush1.msra.mxu0 %v541
        %583 = vmatprep.subr.mxu0 0.0
        %584 = vmatpush1.msra.mxu0 0.0
        %585 = vmatprep.subr.mxu0 0.0
        %586 = vmatpush1.msra.mxu0 0.0
        %587 = vmatprep.subr.mxu0 0.0
        %588 = vmatpush1.msra.mxu0 0.0
        %589 = vmatprep.subr.mxu0 0.0
        %590 = vmatpush1.msra.mxu0 0.0
        %591 = vmatprep.subr.mxu0 0.0
        %592 = vmatpush1.msra.mxu0 0.0
        %593 = vmatprep.subr.mxu0 0.0
        %594 = vmatpush1.msra.mxu0 0.0
        %595 = vmatprep.subr.mxu0 0.0
        %596 = vmatpush1.msra.mxu0 0.0
        %597 = vmatprep.subr.mxu0 0.0
        %598 = vmatpush1.msra.mxu0 0.0
        %599 = vmatprep.subr.mxu0 0.0
        %600 = vmatpush1.msra.mxu0 0.0
        %601 = vmatprep.subr.mxu0 0.0
        %602 = vmatpush1.msra.mxu0 0.0
        %603 = vmatprep.subr.mxu0 0.0
        %604 = vmatpush1.msra.mxu0 0.0
        %605 = vmatprep.subr.mxu0 0.0
        %606 = vmatpush1.msra.mxu0 0.0
        %607 = vmatprep.subr.mxu0 0.0
        %608 = vmatpush1.msra.mxu0 0.0
        %609 = vmatprep.subr.mxu0 0.0
        %610 = vmatpush1.msra.mxu0 0.0
        %611 = vmatprep.subr.mxu0 0.0
        %612 = vmatpush1.msra.mxu0 0.0
        %613 = vmatprep.subr.mxu0 0.0
        %614 = vmatpush1.msra.mxu0 0.0
        %615 = vmatprep.mubr.f32.mxu0 0.0
        %616 = vmatmul.mubr.f32.gmra.mrb[0].mxu0 %v545
        %v617 = vpop.f32.mrb[0].mxu0
        %v618 = vadd.f32 0.0, %v617
        %v619 = vpop.f32.mrb[0].mxu0
        %v620 = vadd.f32 0.0, %v619
        %621 = vdwg.mxu0
        %622 = vmatprep.subr.mxu0 %v484
        %623 = vmatpush1.msra.mxu0 %v483
        %624 = vmatprep.subr.mxu0 %v488
        %625 = vmatpush1.msra.mxu0 %v487
        %626 = vmatprep.subr.mxu0 %v492
        %627 = vmatpush1.msra.mxu0 %v491
        %628 = vmatprep.subr.mxu0 %v496
        %629 = vmatpush1.msra.mxu0 %v495
        %630 = vmatprep.subr.mxu0 %v500
        %631 = vmatpush1.msra.mxu0 %v499
        %632 = vmatprep.subr.mxu0 %v504
        %633 = vmatpush1.msra.mxu0 %v503
        %634 = vmatprep.subr.mxu0 %v508
        %635 = vmatpush1.msra.mxu0 %v507
        %636 = vmatprep.subr.mxu0 %v512
        %637 = vmatpush1.msra.mxu0 %v511
        %638 = vmatprep.subr.mxu0 %v516
        %639 = vmatpush1.msra.mxu0 %v515
        %640 = vmatprep.subr.mxu0 %v520
        %641 = vmatpush1.msra.mxu0 %v519
        %642 = vmatprep.subr.mxu0 %v524
        %643 = vmatpush1.msra.mxu0 %v523
        %644 = vmatprep.subr.mxu0 %v528
        %645 = vmatpush1.msra.mxu0 %v527
        %646 = vmatprep.subr.mxu0 %v532
        %647 = vmatpush1.msra.mxu0 %v531
        %648 = vmatprep.subr.mxu0 %v536
        %649 = vmatpush1.msra.mxu0 %v535
        %650 = vmatprep.subr.mxu0 %v540
        %651 = vmatpush1.msra.mxu0 %v539
        %652 = vmatprep.subr.mxu0 %v544
        %653 = vmatpush1.msra.mxu0 %v543
        %654 = vmatprep.subr.mxu0 0.0
        %655 = vmatpush1.msra.mxu0 0.0
        %656 = vmatprep.subr.mxu0 0.0
        %657 = vmatpush1.msra.mxu0 0.0
        %658 = vmatprep.subr.mxu0 0.0
        %659 = vmatpush1.msra.mxu0 0.0
        %660 = vmatprep.subr.mxu0 0.0
        %661 = vmatpush1.msra.mxu0 0.0
        %662 = vmatprep.subr.mxu0 0.0
        %663 = vmatpush1.msra.mxu0 0.0
        %664 = vmatprep.subr.mxu0 0.0
        %665 = vmatpush1.msra.mxu0 0.0
        %666 = vmatprep.subr.mxu0 0.0
        %667 = vmatpush1.msra.mxu0 0.0
        %668 = vmatprep.subr.mxu0 0.0
        %669 = vmatpush1.msra.mxu0 0.0
        %670 = vmatprep.subr.mxu0 0.0
        %671 = vmatpush1.msra.mxu0 0.0
        %672 = vmatprep.subr.mxu0 0.0
        %673 = vmatpush1.msra.mxu0 0.0
        %674 = vmatprep.subr.mxu0 0.0
        %675 = vmatpush1.msra.mxu0 0.0
        %676 = vmatprep.subr.mxu0 0.0
        %677 = vmatpush1.msra.mxu0 0.0
        %678 = vmatprep.subr.mxu0 0.0
        %679 = vmatpush1.msra.mxu0 0.0
        %680 = vmatprep.subr.mxu0 0.0
        %681 = vmatpush1.msra.mxu0 0.0
        %682 = vmatprep.subr.mxu0 0.0
        %683 = vmatpush1.msra.mxu0 0.0
        %684 = vmatprep.subr.mxu0 0.0
        %685 = vmatpush1.msra.mxu0 0.0
        %686 = vmatprep.mubr.f32.mxu0 0.0
        %687 = vmatmul.mubr.f32.gmra.mrb[0].mxu0 %v545
        %v688 = vpop.f32.mrb[0].mxu0
        %v689 = vadd.f32 0.0, %v688
        %v690 = vpop.f32.mrb[0].mxu0
        %v691 = vadd.f32 0.0, %v690
        %692 = vdwg.mxu0
        %v693 = vadd.f32 %v547, %v618
        %v694 = vadd.f32 %v548, %v620
        %v695 = vadd.f32 %v549, %v689
        %v696 = vadd.f32 %v550, %v691
        %v697 = vxor.u32 %v693, 2147483648
        %v698 = vmul.f32 %v697, 1.442695
        %v699 = vpow.pop %v698
        %v700 = vadd.f32 %v699, 1.0
        %v701 = vrcp.pop %v700
        %v702 = vmul.f32 1.0, %v701
        %v703 = vxor.u32 %v694, 2147483648
        %v704 = vmul.f32 %v703, 1.442695
        %v705 = vpow.pop %v704
        %v706 = vadd.f32 %v705, 1.0
        %v707 = vrcp.pop %v706
        %v708 = vmul.f32 1.0, %v707
        %v709 = vtanh.pop %v695
        %v710 = vxor.u32 %v696, 2147483648
        %v711 = vmul.f32 %v710, 1.442695
        %v712 = vpow.pop %v711
        %v713 = vadd.f32 %v712, 1.0
        %v714 = vrcp.pop %v713
        %v715 = vmul.f32 1.0, %v714
        %v716 = vmul.f32 %v708, %v546
        %v717 = vmul.f32 %v702, %v709
        %v718 = vadd.f32 %v716, %v717
        %v719 = vtanh.pop %v718
        %v720 = vmul.f32 %v715, %v719
        %s721 = scalar_lea.vmem [#allocation4], 32
        %v722 = vld [vmem:[%s721] sm:$0xff]
        %v723 = vld [vmem:[%s721 + $0x8] sm:$0xff]
        %v724 = vld [vmem:[%s721 + $0x10] sm:$0xff]
        %v725 = vld [vmem:[%s721 + $0x18] sm:$0xff]
        %726 = vmatprep.subr.mxu0 %v482
        %727 = vmatpush1.msra.mxu0 %v481
        %728 = vmatprep.subr.mxu0 %v486
        %729 = vmatpush1.msra.mxu0 %v485
        %730 = vmatprep.subr.mxu0 %v490
        %731 = vmatpush1.msra.mxu0 %v489
        %732 = vmatprep.subr.mxu0 %v494
        %733 = vmatpush1.msra.mxu0 %v493
        %734 = vmatprep.subr.mxu0 %v498
        %735 = vmatpush1.msra.mxu0 %v497
        %736 = vmatprep.subr.mxu0 %v502
        %737 = vmatpush1.msra.mxu0 %v501
        %738 = vmatprep.subr.mxu0 %v506
        %739 = vmatpush1.msra.mxu0 %v505
        %740 = vmatprep.subr.mxu0 %v510
        %741 = vmatpush1.msra.mxu0 %v509
        %742 = vmatprep.subr.mxu0 %v514
        %743 = vmatpush1.msra.mxu0 %v513
        %744 = vmatprep.subr.mxu0 %v518
        %745 = vmatpush1.msra.mxu0 %v517
        %746 = vmatprep.subr.mxu0 %v522
        %747 = vmatpush1.msra.mxu0 %v521
        %748 = vmatprep.subr.mxu0 %v526
        %749 = vmatpush1.msra.mxu0 %v525
        %750 = vmatprep.subr.mxu0 %v530
        %751 = vmatpush1.msra.mxu0 %v529
        %752 = vmatprep.subr.mxu0 %v534
        %753 = vmatpush1.msra.mxu0 %v533
        %754 = vmatprep.subr.mxu0 %v538
        %755 = vmatpush1.msra.mxu0 %v537
        %756 = vmatprep.subr.mxu0 %v542
        %757 = vmatpush1.msra.mxu0 %v541
        %758 = vmatprep.subr.mxu0 0.0
        %759 = vmatpush1.msra.mxu0 0.0
        %760 = vmatprep.subr.mxu0 0.0
        %761 = vmatpush1.msra.mxu0 0.0
        %762 = vmatprep.subr.mxu0 0.0
        %763 = vmatpush1.msra.mxu0 0.0
        %764 = vmatprep.subr.mxu0 0.0
        %765 = vmatpush1.msra.mxu0 0.0
        %766 = vmatprep.subr.mxu0 0.0
        %767 = vmatpush1.msra.mxu0 0.0
        %768 = vmatprep.subr.mxu0 0.0
        %769 = vmatpush1.msra.mxu0 0.0
        %770 = vmatprep.subr.mxu0 0.0
        %771 = vmatpush1.msra.mxu0 0.0
        %772 = vmatprep.subr.mxu0 0.0
        %773 = vmatpush1.msra.mxu0 0.0
        %774 = vmatprep.subr.mxu0 0.0
        %775 = vmatpush1.msra.mxu0 0.0
        %776 = vmatprep.subr.mxu0 0.0
        %777 = vmatpush1.msra.mxu0 0.0
        %778 = vmatprep.subr.mxu0 0.0
        %779 = vmatpush1.msra.mxu0 0.0
        %780 = vmatprep.subr.mxu0 0.0
        %781 = vmatpush1.msra.mxu0 0.0
        %782 = vmatprep.subr.mxu0 0.0
        %783 = vmatpush1.msra.mxu0 0.0
        %784 = vmatprep.subr.mxu0 0.0
        %785 = vmatpush1.msra.mxu0 0.0
        %786 = vmatprep.subr.mxu0 0.0
        %787 = vmatpush1.msra.mxu0 0.0
        %788 = vmatprep.subr.mxu0 0.0
        %789 = vmatpush1.msra.mxu0 0.0
        %790 = vmatprep.mubr.f32.mxu0 0.0
        %791 = vmatmul.mubr.f32.gmra.mrb[0].mxu0 %v720
        %v792 = vpop.f32.mrb[0].mxu0
        %v793 = vadd.f32 0.0, %v792
        %v794 = vpop.f32.mrb[0].mxu0
        %v795 = vadd.f32 0.0, %v794
        %796 = vdwg.mxu0
        %797 = vmatprep.subr.mxu0 %v484
        %798 = vmatpush1.msra.mxu0 %v483
        %799 = vmatprep.subr.mxu0 %v488
        %800 = vmatpush1.msra.mxu0 %v487
        %801 = vmatprep.subr.mxu0 %v492
        %802 = vmatpush1.msra.mxu0 %v491
        %803 = vmatprep.subr.mxu0 %v496
        %804 = vmatpush1.msra.mxu0 %v495
        %805 = vmatprep.subr.mxu0 %v500
        %806 = vmatpush1.msra.mxu0 %v499
        %807 = vmatprep.subr.mxu0 %v504
        %808 = vmatpush1.msra.mxu0 %v503
        %809 = vmatprep.subr.mxu0 %v508
        %810 = vmatpush1.msra.mxu0 %v507
        %811 = vmatprep.subr.mxu0 %v512
        %812 = vmatpush1.msra.mxu0 %v511
        %813 = vmatprep.subr.mxu0 %v516
        %814 = vmatpush1.msra.mxu0 %v515
        %815 = vmatprep.subr.mxu0 %v520
        %816 = vmatpush1.msra.mxu0 %v519
        %817 = vmatprep.subr.mxu0 %v524
        %818 = vmatpush1.msra.mxu0 %v523
        %819 = vmatprep.subr.mxu0 %v528
        %820 = vmatpush1.msra.mxu0 %v527
        %821 = vmatprep.subr.mxu0 %v532
        %822 = vmatpush1.msra.mxu0 %v531
        %823 = vmatprep.subr.mxu0 %v536
        %824 = vmatpush1.msra.mxu0 %v535
        %825 = vmatprep.subr.mxu0 %v540
        %826 = vmatpush1.msra.mxu0 %v539
        %827 = vmatprep.subr.mxu0 %v544
        %828 = vmatpush1.msra.mxu0 %v543
        %829 = vmatprep.subr.mxu0 0.0
        %830 = vmatpush1.msra.mxu0 0.0
        %831 = vmatprep.subr.mxu0 0.0
        %832 = vmatpush1.msra.mxu0 0.0
        %833 = vmatprep.subr.mxu0 0.0
        %834 = vmatpush1.msra.mxu0 0.0
        %835 = vmatprep.subr.mxu0 0.0
        %836 = vmatpush1.msra.mxu0 0.0
        %837 = vmatprep.subr.mxu0 0.0
        %838 = vmatpush1.msra.mxu0 0.0
        %839 = vmatprep.subr.mxu0 0.0
        %840 = vmatpush1.msra.mxu0 0.0
        %841 = vmatprep.subr.mxu0 0.0
        %842 = vmatpush1.msra.mxu0 0.0
        %843 = vmatprep.subr.mxu0 0.0
        %844 = vmatpush1.msra.mxu0 0.0
        %845 = vmatprep.subr.mxu0 0.0
        %846 = vmatpush1.msra.mxu0 0.0
        %847 = vmatprep.subr.mxu0 0.0
        %848 = vmatpush1.msra.mxu0 0.0
        %849 = vmatprep.subr.mxu0 0.0
        %850 = vmatpush1.msra.mxu0 0.0
        %851 = vmatprep.subr.mxu0 0.0
        %852 = vmatpush1.msra.mxu0 0.0
        %853 = vmatprep.subr.mxu0 0.0
        %854 = vmatpush1.msra.mxu0 0.0
        %855 = vmatprep.subr.mxu0 0.0
        %856 = vmatpush1.msra.mxu0 0.0
        %857 = vmatprep.subr.mxu0 0.0
        %858 = vmatpush1.msra.mxu0 0.0
        %859 = vmatprep.subr.mxu0 0.0
        %860 = vmatpush1.msra.mxu0 0.0
        %861 = vmatprep.mubr.f32.mxu0 0.0
        %862 = vmatmul.mubr.f32.gmra.mrb[0].mxu0 %v720
        %v863 = vpop.f32.mrb[0].mxu0
        %v864 = vadd.f32 0.0, %v863
        %v865 = vpop.f32.mrb[0].mxu0
        %v866 = vadd.f32 0.0, %v865
        %867 = vdwg.mxu0
        %v868 = vadd.f32 %v722, %v793
        %v869 = vadd.f32 %v723, %v795
        %v870 = vadd.f32 %v724, %v864
        %v871 = vadd.f32 %v725, %v866
        %v872 = vxor.u32 %v868, 2147483648
        %v873 = vmul.f32 %v872, 1.442695
        %v874 = vpow.pop %v873
        %v875 = vadd.f32 %v874, 1.0
        %v876 = vrcp.pop %v875
        %v877 = vmul.f32 1.0, %v876
        %v878 = vxor.u32 %v869, 2147483648
        %v879 = vmul.f32 %v878, 1.442695
        %v880 = vpow.pop %v879
        %v881 = vadd.f32 %v880, 1.0
        %v882 = vrcp.pop %v881
        %v883 = vmul.f32 1.0, %v882
        %v884 = vtanh.pop %v870
        %v885 = vxor.u32 %v871, 2147483648
        %v886 = vmul.f32 %v885, 1.442695
        %v887 = vpow.pop %v886
        %v888 = vadd.f32 %v887, 1.0
        %v889 = vrcp.pop %v888
        %v890 = vmul.f32 1.0, %v889
        %v891 = vmul.f32 %v883, %v718
        %v892 = vmul.f32 %v877, %v884
        %v893 = vadd.f32 %v891, %v892
        %v894 = vtanh.pop %v893
        %v895 = vmul.f32 %v890, %v894
        %s896 = scalar_lea.vmem [#allocation4], 64
        %v897 = vld [vmem:[%s896] sm:$0xff]
        %v898 = vld [vmem:[%s896 + $0x8] sm:$0xff]
        %v899 = vld [vmem:[%s896 + $0x10] sm:$0xff]
        %v900 = vld [vmem:[%s896 + $0x18] sm:$0xff]
        %901 = vmatprep.subr.mxu0 %v482
        %902 = vmatpush1.msra.mxu0 %v481
        %903 = vmatprep.subr.mxu0 %v486
        %904 = vmatpush1.msra.mxu0 %v485
        %905 = vmatprep.subr.mxu0 %v490
        %906 = vmatpush1.msra.mxu0 %v489
        %907 = vmatprep.subr.mxu0 %v494
        %908 = vmatpush1.msra.mxu0 %v493
        %909 = vmatprep.subr.mxu0 %v498
        %910 = vmatpush1.msra.mxu0 %v497
        %911 = vmatprep.subr.mxu0 %v502
        %912 = vmatpush1.msra.mxu0 %v501
        %913 = vmatprep.subr.mxu0 %v506
        %914 = vmatpush1.msra.mxu0 %v505
        %915 = vmatprep.subr.mxu0 %v510
        %916 = vmatpush1.msra.mxu0 %v509
        %917 = vmatprep.subr.mxu0 %v514
        %918 = vmatpush1.msra.mxu0 %v513
        %919 = vmatprep.subr.mxu0 %v518
        %920 = vmatpush1.msra.mxu0 %v517
        %921 = vmatprep.subr.mxu0 %v522
        %922 = vmatpush1.msra.mxu0 %v521
        %923 = vmatprep.subr.mxu0 %v526
        %924 = vmatpush1.msra.mxu0 %v525
        %925 = vmatprep.subr.mxu0 %v530
        %926 = vmatpush1.msra.mxu0 %v529
        %927 = vmatprep.subr.mxu0 %v534
        %928 = vmatpush1.msra.mxu0 %v533
        %929 = vmatprep.subr.mxu0 %v538
        %930 = vmatpush1.msra.mxu0 %v537
        %931 = vmatprep.subr.mxu0 %v542
        %932 = vmatpush1.msra.mxu0 %v541
        %933 = vmatprep.subr.mxu0 0.0
        %934 = vmatpush1.msra.mxu0 0.0
        %935 = vmatprep.subr.mxu0 0.0
        %936 = vmatpush1.msra.mxu0 0.0
        %937 = vmatprep.subr.mxu0 0.0
        %938 = vmatpush1.msra.mxu0 0.0
        %939 = vmatprep.subr.mxu0 0.0
        %940 = vmatpush1.msra.mxu0 0.0
        %941 = vmatprep.subr.mxu0 0.0
        %942 = vmatpush1.msra.mxu0 0.0
        %943 = vmatprep.subr.mxu0 0.0
        %944 = vmatpush1.msra.mxu0 0.0
        %945 = vmatprep.subr.mxu0 0.0
        %946 = vmatpush1.msra.mxu0 0.0
        %947 = vmatprep.subr.mxu0 0.0
        %948 = vmatpush1.msra.mxu0 0.0
        %949 = vmatprep.subr.mxu0 0.0
        %950 = vmatpush1.msra.mxu0 0.0
        %951 = vmatprep.subr.mxu0 0.0
        %952 = vmatpush1.msra.mxu0 0.0
        %953 = vmatprep.subr.mxu0 0.0
        %954 = vmatpush1.msra.mxu0 0.0
        %955 = vmatprep.subr.mxu0 0.0
        %956 = vmatpush1.msra.mxu0 0.0
        %957 = vmatprep.subr.mxu0 0.0
        %958 = vmatpush1.msra.mxu0 0.0
        %959 = vmatprep.subr.mxu0 0.0
        %960 = vmatpush1.msra.mxu0 0.0
        %961 = vmatprep.subr.mxu0 0.0
        %962 = vmatpush1.msra.mxu0 0.0
        %963 = vmatprep.subr.mxu0 0.0
        %964 = vmatpush1.msra.mxu0 0.0
        %965 = vmatprep.mubr.f32.mxu0 0.0
        %966 = vmatmul.mubr.f32.gmra.mrb[0].mxu0 %v895
        %v967 = vpop.f32.mrb[0].mxu0
        %v968 = vadd.f32 0.0, %v967
        %v969 = vpop.f32.mrb[0].mxu0
        %v970 = vadd.f32 0.0, %v969
        %971 = vdwg.mxu0
        %972 = vmatprep.subr.mxu0 %v484
        %973 = vmatpush1.msra.mxu0 %v483
        %974 = vmatprep.subr.mxu0 %v488
        %975 = vmatpush1.msra.mxu0 %v487
        %976 = vmatprep.subr.mxu0 %v492
        %977 = vmatpush1.msra.mxu0 %v491
        %978 = vmatprep.subr.mxu0 %v496
        %979 = vmatpush1.msra.mxu0 %v495
        %980 = vmatprep.subr.mxu0 %v500
        %981 = vmatpush1.msra.mxu0 %v499
        %982 = vmatprep.subr.mxu0 %v504
        %983 = vmatpush1.msra.mxu0 %v503
        %984 = vmatprep.subr.mxu0 %v508
        %985 = vmatpush1.msra.mxu0 %v507
        %986 = vmatprep.subr.mxu0 %v512
        %987 = vmatpush1.msra.mxu0 %v511
        %988 = vmatprep.subr.mxu0 %v516
        %989 = vmatpush1.msra.mxu0 %v515
        %990 = vmatprep.subr.mxu0 %v520
        %991 = vmatpush1.msra.mxu0 %v519
        %992 = vmatprep.subr.mxu0 %v524
        %993 = vmatpush1.msra.mxu0 %v523
        %994 = vmatprep.subr.mxu0 %v528
        %995 = vmatpush1.msra.mxu0 %v527
        %996 = vmatprep.subr.mxu0 %v532
        %997 = vmatpush1.msra.mxu0 %v531
        %998 = vmatprep.subr.mxu0 %v536
        %999 = vmatpush1.msra.mxu0 %v535
        %1000 = vmatprep.subr.mxu0 %v540
        %1001 = vmatpush1.msra.mxu0 %v539
        %1002 = vmatprep.subr.mxu0 %v544
        %1003 = vmatpush1.msra.mxu0 %v543
        %1004 = vmatprep.subr.mxu0 0.0
        %1005 = vmatpush1.msra.mxu0 0.0
        %1006 = vmatprep.subr.mxu0 0.0
        %1007 = vmatpush1.msra.mxu0 0.0
        %1008 = vmatprep.subr.mxu0 0.0
        %1009 = vmatpush1.msra.mxu0 0.0
        %1010 = vmatprep.subr.mxu0 0.0
        %1011 = vmatpush1.msra.mxu0 0.0
        %1012 = vmatprep.subr.mxu0 0.0
        %1013 = vmatpush1.msra.mxu0 0.0
        %1014 = vmatprep.subr.mxu0 0.0
        %1015 = vmatpush1.msra.mxu0 0.0
        %1016 = vmatprep.subr.mxu0 0.0
        %1017 = vmatpush1.msra.mxu0 0.0
        %1018 = vmatprep.subr.mxu0 0.0
        %1019 = vmatpush1.msra.mxu0 0.0
        %1020 = vmatprep.subr.mxu0 0.0
        %1021 = vmatpush1.msra.mxu0 0.0
        %1022 = vmatprep.subr.mxu0 0.0
        %1023 = vmatpush1.msra.mxu0 0.0
        %1024 = vmatprep.subr.mxu0 0.0
        %1025 = vmatpush1.msra.mxu0 0.0
        %1026 = vmatprep.subr.mxu0 0.0
        %1027 = vmatpush1.msra.mxu0 0.0
        %1028 = vmatprep.subr.mxu0 0.0
        %1029 = vmatpush1.msra.mxu0 0.0
        %1030 = vmatprep.subr.mxu0 0.0
        %1031 = vmatpush1.msra.mxu0 0.0
        %1032 = vmatprep.subr.mxu0 0.0
        %1033 = vmatpush1.msra.mxu0 0.0
        %1034 = vmatprep.subr.mxu0 0.0
        %1035 = vmatpush1.msra.mxu0 0.0
        %1036 = vmatprep.mubr.f32.mxu0 0.0
        %1037 = vmatmul.mubr.f32.gmra.mrb[0].mxu0 %v895
        %v1038 = vpop.f32.mrb[0].mxu0
        %v1039 = vadd.f32 0.0, %v1038
        %v1040 = vpop.f32.mrb[0].mxu0
        %v1041 = vadd.f32 0.0, %v1040
        %1042 = vdwg.mxu0
        %v1043 = vadd.f32 %v897, %v968
        %v1044 = vadd.f32 %v898, %v970
        %v1045 = vadd.f32 %v899, %v1039
        %v1046 = vadd.f32 %v900, %v1041
        %v1047 = vxor.u32 %v1043, 2147483648
        %v1048 = vmul.f32 %v1047, 1.442695
        %v1049 = vpow.pop %v1048
        %v1050 = vadd.f32 %v1049, 1.0
        %v1051 = vrcp.pop %v1050
        %v1052 = vmul.f32 1.0, %v1051
        %v1053 = vxor.u32 %v1044, 2147483648
        %v1054 = vmul.f32 %v1053, 1.442695
        %v1055 = vpow.pop %v1054
        %v1056 = vadd.f32 %v1055, 1.0
        %v1057 = vrcp.pop %v1056
        %v1058 = vmul.f32 1.0, %v1057
        %v1059 = vtanh.pop %v1045
        %v1060 = vxor.u32 %v1046, 2147483648
        %v1061 = vmul.f32 %v1060, 1.442695
        %v1062 = vpow.pop %v1061
        %v1063 = vadd.f32 %v1062, 1.0
        %v1064 = vrcp.pop %v1063
        %v1065 = vmul.f32 1.0, %v1064
        %v1066 = vmul.f32 %v1058, %v893
        %v1067 = vmul.f32 %v1052, %v1059
        %v1068 = vadd.f32 %v1066, %v1067
        %v1069 = vtanh.pop %v1068
        %v1070 = vmul.f32 %v1065, %v1069
        %s1071 = scalar_lea.vmem [#allocation4], 96
        %v1072 = vld [vmem:[%s1071] sm:$0xff]
        %v1073 = vld [vmem:[%s1071 + $0x8] sm:$0xff]
        %v1074 = vld [vmem:[%s1071 + $0x10] sm:$0xff]
        %v1075 = vld [vmem:[%s1071 + $0x18] sm:$0xff]
        %1076 = vmatprep.subr.mxu0 %v482
        %1077 = vmatpush1.msra.mxu0 %v481
        %1078 = vmatprep.subr.mxu0 %v486
        %1079 = vmatpush1.msra.mxu0 %v485
        %1080 = vmatprep.subr.mxu0 %v490
        %1081 = vmatpush1.msra.mxu0 %v489
        %1082 = vmatprep.subr.mxu0 %v494
        %1083 = vmatpush1.msra.mxu0 %v493
        %1084 = vmatprep.subr.mxu0 %v498
        %1085 = vmatpush1.msra.mxu0 %v497
        %1086 = vmatprep.subr.mxu0 %v502
        %1087 = vmatpush1.msra.mxu0 %v501
        %1088 = vmatprep.subr.mxu0 %v506
        %1089 = vmatpush1.msra.mxu0 %v505
        %1090 = vmatprep.subr.mxu0 %v510
        %1091 = vmatpush1.msra.mxu0 %v509
        %1092 = vmatprep.subr.mxu0 %v514
        %1093 = vmatpush1.msra.mxu0 %v513
        %1094 = vmatprep.subr.mxu0 %v518
        %1095 = vmatpush1.msra.mxu0 %v517
        %1096 = vmatprep.subr.mxu0 %v522
        %1097 = vmatpush1.msra.mxu0 %v521
        %1098 = vmatprep.subr.mxu0 %v526
        %1099 = vmatpush1.msra.mxu0 %v525
        %1100 = vmatprep.subr.mxu0 %v530
        %1101 = vmatpush1.msra.mxu0 %v529
        %1102 = vmatprep.subr.mxu0 %v534
        %1103 = vmatpush1.msra.mxu0 %v533
        %1104 = vmatprep.subr.mxu0 %v538
        %1105 = vmatpush1.msra.mxu0 %v537
        %1106 = vmatprep.subr.mxu0 %v542
        %1107 = vmatpush1.msra.mxu0 %v541
        %1108 = vmatprep.subr.mxu0 0.0
        %1109 = vmatpush1.msra.mxu0 0.0
        %1110 = vmatprep.subr.mxu0 0.0
        %1111 = vmatpush1.msra.mxu0 0.0
        %1112 = vmatprep.subr.mxu0 0.0
        %1113 = vmatpush1.msra.mxu0 0.0
        %1114 = vmatprep.subr.mxu0 0.0
        %1115 = vmatpush1.msra.mxu0 0.0
        %1116 = vmatprep.subr.mxu0 0.0
        %1117 = vmatpush1.msra.mxu0 0.0
        %1118 = vmatprep.subr.mxu0 0.0
        %1119 = vmatpush1.msra.mxu0 0.0
        %1120 = vmatprep.subr.mxu0 0.0
        %1121 = vmatpush1.msra.mxu0 0.0
        %1122 = vmatprep.subr.mxu0 0.0
        %1123 = vmatpush1.msra.mxu0 0.0
        %1124 = vmatprep.subr.mxu0 0.0
        %1125 = vmatpush1.msra.mxu0 0.0
        %1126 = vmatprep.subr.mxu0 0.0
        %1127 = vmatpush1.msra.mxu0 0.0
        %1128 = vmatprep.subr.mxu0 0.0
        %1129 = vmatpush1.msra.mxu0 0.0
        %1130 = vmatprep.subr.mxu0 0.0
        %1131 = vmatpush1.msra.mxu0 0.0
        %1132 = vmatprep.subr.mxu0 0.0
        %1133 = vmatpush1.msra.mxu0 0.0
        %1134 = vmatprep.subr.mxu0 0.0
        %1135 = vmatpush1.msra.mxu0 0.0
        %1136 = vmatprep.subr.mxu0 0.0
        %1137 = vmatpush1.msra.mxu0 0.0
        %1138 = vmatprep.subr.mxu0 0.0
        %1139 = vmatpush1.msra.mxu0 0.0
        %1140 = vmatprep.mubr.f32.mxu0 0.0
        %1141 = vmatmul.mubr.f32.gmra.mrb[0].mxu0 %v1070
        %v1142 = vpop.f32.mrb[0].mxu0
        %v1143 = vadd.f32 0.0, %v1142
        %v1144 = vpop.f32.mrb[0].mxu0
        %v1145 = vadd.f32 0.0, %v1144
        %1146 = vdwg.mxu0
        %1147 = vmatprep.subr.mxu0 %v484
        %1148 = vmatpush1.msra.mxu0 %v483
        %1149 = vmatprep.subr.mxu0 %v488
        %1150 = vmatpush1.msra.mxu0 %v487
        %1151 = vmatprep.subr.mxu0 %v492
        %1152 = vmatpush1.msra.mxu0 %v491
        %1153 = vmatprep.subr.mxu0 %v496
        %1154 = vmatpush1.msra.mxu0 %v495
        %1155 = vmatprep.subr.mxu0 %v500
        %1156 = vmatpush1.msra.mxu0 %v499
        %1157 = vmatprep.subr.mxu0 %v504
        %1158 = vmatpush1.msra.mxu0 %v503
        %1159 = vmatprep.subr.mxu0 %v508
        %1160 = vmatpush1.msra.mxu0 %v507
        %1161 = vmatprep.subr.mxu0 %v512
        %1162 = vmatpush1.msra.mxu0 %v511
        %1163 = vmatprep.subr.mxu0 %v516
        %1164 = vmatpush1.msra.mxu0 %v515
        %1165 = vmatprep.subr.mxu0 %v520
        %1166 = vmatpush1.msra.mxu0 %v519
        %1167 = vmatprep.subr.mxu0 %v524
        %1168 = vmatpush1.msra.mxu0 %v523
        %1169 = vmatprep.subr.mxu0 %v528
        %1170 = vmatpush1.msra.mxu0 %v527
        %1171 = vmatprep.subr.mxu0 %v532
        %1172 = vmatpush1.msra.mxu0 %v531
        %1173 = vmatprep.subr.mxu0 %v536
        %1174 = vmatpush1.msra.mxu0 %v535
        %1175 = vmatprep.subr.mxu0 %v540
        %1176 = vmatpush1.msra.mxu0 %v539
        %1177 = vmatprep.subr.mxu0 %v544
        %1178 = vmatpush1.msra.mxu0 %v543
        %1179 = vmatprep.subr.mxu0 0.0
        %1180 = vmatpush1.msra.mxu0 0.0
        %1181 = vmatprep.subr.mxu0 0.0
        %1182 = vmatpush1.msra.mxu0 0.0
        %1183 = vmatprep.subr.mxu0 0.0
        %1184 = vmatpush1.msra.mxu0 0.0
        %1185 = vmatprep.subr.mxu0 0.0
        %1186 = vmatpush1.msra.mxu0 0.0
        %1187 = vmatprep.subr.mxu0 0.0
        %1188 = vmatpush1.msra.mxu0 0.0
        %1189 = vmatprep.subr.mxu0 0.0
        %1190 = vmatpush1.msra.mxu0 0.0
        %1191 = vmatprep.subr.mxu0 0.0
        %1192 = vmatpush1.msra.mxu0 0.0
        %1193 = vmatprep.subr.mxu0 0.0
        %1194 = vmatpush1.msra.mxu0 0.0
        %1195 = vmatprep.subr.mxu0 0.0
        %1196 = vmatpush1.msra.mxu0 0.0
        %1197 = vmatprep.subr.mxu0 0.0
        %1198 = vmatpush1.msra.mxu0 0.0
        %1199 = vmatprep.subr.mxu0 0.0
        %1200 = vmatpush1.msra.mxu0 0.0
        %1201 = vmatprep.subr.mxu0 0.0
        %1202 = vmatpush1.msra.mxu0 0.0
        %1203 = vmatprep.subr.mxu0 0.0
        %1204 = vmatpush1.msra.mxu0 0.0
        %1205 = vmatprep.subr.mxu0 0.0
        %1206 = vmatpush1.msra.mxu0 0.0
        %1207 = vmatprep.subr.mxu0 0.0
        %1208 = vmatpush1.msra.mxu0 0.0
        %1209 = vmatprep.subr.mxu0 0.0
        %1210 = vmatpush1.msra.mxu0 0.0
        %1211 = vmatprep.mubr.f32.mxu0 0.0
        %1212 = vmatmul.mubr.f32.gmra.mrb[0].mxu0 %v1070
        %v1213 = vpop.f32.mrb[0].mxu0
        %v1214 = vadd.f32 0.0, %v1213
        %v1215 = vpop.f32.mrb[0].mxu0
        %v1216 = vadd.f32 0.0, %v1215
        %1217 = vdwg.mxu0
        %v1218 = vadd.f32 %v1072, %v1143
        %v1219 = vadd.f32 %v1073, %v1145
        %v1220 = vadd.f32 %v1074, %v1214
        %v1221 = vadd.f32 %v1075, %v1216
        %v1222 = vxor.u32 %v1218, 2147483648
        %v1223 = vmul.f32 %v1222, 1.442695
        %v1224 = vpow.pop %v1223
        %v1225 = vadd.f32 %v1224, 1.0
        %v1226 = vrcp.pop %v1225
        %v1227 = vmul.f32 1.0, %v1226
        %v1228 = vxor.u32 %v1219, 2147483648
        %v1229 = vmul.f32 %v1228, 1.442695
        %v1230 = vpow.pop %v1229
        %v1231 = vadd.f32 %v1230, 1.0
        %v1232 = vrcp.pop %v1231
        %v1233 = vmul.f32 1.0, %v1232
        %v1234 = vtanh.pop %v1220
        %v1235 = vxor.u32 %v1221, 2147483648
        %v1236 = vmul.f32 %v1235, 1.442695
        %v1237 = vpow.pop %v1236
        %v1238 = vadd.f32 %v1237, 1.0
        %v1239 = vrcp.pop %v1238
        %v1240 = vmul.f32 1.0, %v1239
        %v1241 = vmul.f32 %v1233, %v1068
        %v1242 = vmul.f32 %v1227, %v1234
        %v1243 = vadd.f32 %v1241, %v1242
        %v1244 = vtanh.pop %v1243
        %v1245 = vmul.f32 %v1240, %v1244
        %1246 = vst [vmem:[#allocation2] sm:$0xff] %v1245
        %1247 = vst [vmem:[#allocation3] sm:$0xff] %v1243
        %p1248 = scmp.eq.s32.totalorder %s20, 1
        // Predicated region
        $region53: #{tpu_custom_call.1} parent=35 // pred_check
          %p1249 = pneg %p1248
        $region54: #{tpu_custom_call.1} parent=35 // pred_check_branch
          %1251 = sbr.rel (%p1249) target = $region56
        $region55: #{tpu_custom_call.1} parent=35 // pred_region
          %1252 = vst [vmem:[#allocation11] sm:$0xff] %v1245
        $region56: #{tpu_custom_call.1} parent=35 // pred_fallthru
          _
        // Predicated region
        $region57: #{tpu_custom_call.1} parent=35 // pred_check
          %p1253 = pneg %p122
        $region58: #{tpu_custom_call.1} parent=35 // pred_check_branch
          %1255 = sbr.rel (%p1253) target = $region60
        $region59: #{tpu_custom_call.1} parent=35 // pred_region
          %s1257 = ssub.s32 128, 128
          %1258 = vsyncadd [#allocation7], %s1257
          %s1260 = sshll.u32 [#allocation11], 4
          %s1261 = int_to_ptr.vmem [resolvable:$true] %s1260
          %1263 = dma.vmem_to_hbm [thread:$0]  %s1261, 128, %s4, [#allocation7]
        $region60: #{tpu_custom_call.1} parent=35 // pred_fallthru
          _
        // Predicated region
        $region61: #{tpu_custom_call.1} parent=35 // pred_check
          %p1264 = pneg %p122
        $region62: #{tpu_custom_call.1} parent=35 // pred_check_branch
          %1266 = sbr.rel (%p1264) target = $region64
        $region63: #{tpu_custom_call.1} parent=35 // pred_region
          %1267 = dma.done [#allocation7], 128
        $region64: #{tpu_custom_call.1} parent=35 // pred_fallthru
          _
      $region36: #{tpu_custom_call.1} parent=5 // pred_fallthru
        _
      %p1268 = scmp.le.s32.totalorder 2, %s15
      // Predicated region
      $region65: #{tpu_custom_call.1} parent=5 // pred_check
        %p1269 = pneg %p1268
      $region66: #{tpu_custom_call.1} parent=5 // pred_check_branch
        %1271 = sbr.rel (%p1269) target = $region68
      $region67: #{tpu_custom_call.1} parent=5 // pred_region
        %s1272 = ssub.s32 %s15, 2
      $region68: #{tpu_custom_call.1} parent=5 // pred_fallthru
        _
    $region6: #{tpu_custom_call.1} parent=1 // loop_footer
      %s19 = sadd.s32 1, %s15
    $region7: #{tpu_custom_call.1} parent=1 // loop_footer_branch
      %14 = sbr.rel target = $region3
    $region8: #{tpu_custom_call.1} parent=1 // loop_exit
      _
    %1273 = vsyncpa [#allocation6], 1
    %s1274 = scalar_lea.sflag [#allocation6], 1
    %1275 = vsyncpa %s1274, 1
    %1276 = vsyncpa [#allocation9], 1
    %1277 = vsyncpa [#allocation7], 1
    %s1278 = scalar_lea.sflag [#allocation7], 1
    %1279 = vsyncpa %s1278, 1

</llo_original>
